<compile_context>
chip_gen: v7x
topology: tpu7x:2x2x1
jax: 0.10.0
libtpu: 0.0.40
codegen_flags: <defaults>
</compile_context>

<pallas_src>
import jax
import jax.numpy as jnp
from jax.experimental import pallas as pl
from jax.experimental.pallas import tpu as pltpu


LANE = 128      # f32 lane width
SUBLANE = 8     # f32 sublane count


def _round_up(x, m):
    return ((x + m - 1) // m) * m


def _pick_batch_tile(bp_min, target=128, min_split=64):
    """Batch tile size (multiple of 8).

    Big batches get `target`-row tiles (high MXU-row occupancy in the
    recurrent matmul) and automatically >=2 tiles on the "parallel" axis.
    Medium batches are split into two tiles only if each half still has
    >= `min_split` rows (keeps both v7x TensorCores busy without doubling the
    sequential step count for tiny tiles on 1-TC v5e/v6e).  Small batches use
    a single tile.
    """
    if bp_min >= 2 * target:
        return target
    if bp_min >= 2 * min_split:
        return _round_up((bp_min + 1) // 2, SUBLANE)
    return bp_min


def _pick_time_tile(T, Bb, Hp, compute_itemsize, budget_bytes=48 * 2**20,
                    max_tb=64):
    """Timesteps per grid step, sized against VMEM (not vregs).

    Resident VMEM ~= 2x double-buffered (x, out) tiles + the z/h scratch
    (5 block-sized f32 buffers) + double-buffered bf16 weights.
    """
    Tb = min(max_tb, _round_up(T, SUBLANE))
    weights_resident = 2 * 2 * Hp * Hp * compute_itemsize
    while Tb > SUBLANE and weights_resident + 5 * Bb * Tb * Hp * 4 > budget_bytes:
        Tb -= SUBLANE
    return Tb


def _residual_rnn_kernel(x_ref, wih_t_ref, whh_t_ref, b_ref, out_ref,
                         h_carry, zh_scratch):
    """One (batch-tile, time-block) grid step.

    x_ref / out_ref : (Bb, Tb, Hp)  f32 batch-first time block
    wih_t_ref       : (Hp, Hp)      W_ih^T, bf16 (constant across the grid)
    whh_t_ref       : (Hp, Hp)      W_hh^T, bf16 (constant across the grid)
    b_ref           : (1, Hp)       b_ih + b_hh, f32
    h_carry         : (Bb, Hp)      f32 hidden state carried across time blocks
    zh_scratch      : (Bb, Tb, Hp)  f32; holds z_i before step i, h_i after it
    """
    t_blk = pl.program_id(1)

    # h_0 = 0 at the start of each batch tile's sequence.  Correctness relies
    # on time being the inner, sequentially executed ("arbitrary") grid axis.
    @pl.when(t_blk == 0)
    def _():
        h_carry[...] = jnp.zeros_like(h_carry)

    Bb, Tb, Hp = x_ref.shape
    mxu_dtype = wih_t_ref.dtype                     # bf16 operands, f32 accum

    # ---- Hoisted input projection: ONE (Bb*Tb, Hp) @ (Hp, Hp) MXU matmul for
    # the whole block, staged straight into VMEM scratch so neither x nor z
    # stays live (in vregs) across the unrolled recurrence.
    x2d = x_ref[...].reshape(Bb * Tb, Hp)
    z = jnp.dot(x2d.astype(mxu_dtype), wih_t_ref[...],
                preferred_element_type=jnp.float32) + b_ref[...]
    zh_scratch[...] = z.reshape(Bb, Tb, Hp)

    whh_t = whh_t_ref[...]                          # (Hp, Hp) bf16, reused
    h = h_carry[...]                                # (Bb, Hp) f32 carried state

    # ---- Sequential recurrence, statically unrolled (static indices).  Each
    # step reads its pre-projected z_i from zh_scratch and overwrites that
    # same slot with h_i, so one scratch doubles as the hidden-state stack.
    # The per-step (Bb, 1, Hp) scratch accesses are sublane-strided but sit
    # off the h_{t-1}->h_t latency chain (MXU + EUP); the OUTPUT is written
    # once, below, as a single dense block store.
    for i in range(Tb):
        h = jnp.tanh(zh_scratch[:, i, :]
                     + jnp.dot(h.astype(mxu_dtype), whh_t,
                               preferred_element_type=jnp.float32))
        zh_scratch[:, i, :] = h

    h_carry[...] = h

    # ---- ResidualWrapper4RNN: out = inputs + RNN(inputs)[0].
    # One fused, lane- and sublane-dense full-block store (no masked vst).
    out_ref[...] = (x_ref[...] + zh_scratch[...]).astype(out_ref.dtype)


def residual_rnn_forward(inputs, w_ih, w_hh, b_ih, b_hh,
                         compute_dtype=jnp.bfloat16):
    """inputs: (B, T, H) batch_first float32. Returns inputs + RNN(inputs)[0].

    Matmuls use `compute_dtype` operands (bf16 by default) with f32
    accumulation; tanh and the residual add are f32.
    """
    B, T, H = inputs.shape
    f32 = jnp.float32
    itemsize = jnp.dtype(compute_dtype).itemsize

    Hp = _round_up(H, LANE)                    # lane-dense hidden dim
    bp_min = _round_up(B, SUBLANE)             # f32 sublane-dense batch
    Bb = _pick_batch_tile(bp_min)              # batch tile ("parallel" axis)
    Bp = _round_up(bp_min, Bb)
    Tb = _pick_time_tile(T, Bb, Hp, itemsize)  # timesteps per grid step
    Tp = _round_up(T, Tb)

    # Zero padding is exact: padded H lanes stay identically zero through the
    # recurrence; padded batch rows / trailing timesteps are sliced off.
    x_p = jnp.pad(inputs.astype(f32), ((0, Bp - B), (0, Tp - T), (0, Hp - H)))
    wih_t = jnp.pad(jnp.transpose(w_ih).astype(f32),
                    ((0, Hp - H), (0, Hp - H))).astype(compute_dtype)
    whh_t = jnp.pad(jnp.transpose(w_hh).astype(f32),
                    ((0, Hp - H), (0, Hp - H))).astype(compute_dtype)
    bias = jnp.pad((b_ih + b_hh).astype(f32), (0, Hp - H)).reshape(1, Hp)

    grid = (Bp // Bb, Tp // Tb)

    # Explicit scoped-VMEM budget: double-buffered x/out tiles + z/h scratch
    # + (double-buffered) bf16 weights + carried hidden state, with headroom.
    block_bytes = Bb * Tb * Hp * 4
    weight_bytes = Hp * Hp * itemsize
    vmem_est = (5 * block_bytes + 4 * weight_bytes
                + Bb * Hp * 4 + 2 * Hp * 4)
    vmem_limit = int(min(56 * 2**20, max(32 * 2**20, 1.5 * vmem_est)))

    out_p = pl.pallas_call(
        _residual_rnn_kernel,
        out_shape=jax.ShapeDtypeStruct((Bp, Tp, Hp), f32),
        grid_spec=pltpu.PrefetchScalarGridSpec(
            num_scalar_prefetch=0,
            grid=grid,
            in_specs=[
                pl.BlockSpec((Bb, Tb, Hp), lambda b, t: (b, t, 0)),  # x block
                pl.BlockSpec((Hp, Hp), lambda b, t: (0, 0)),         # W_ih^T
                pl.BlockSpec((Hp, Hp), lambda b, t: (0, 0)),         # W_hh^T
                pl.BlockSpec((1, Hp), lambda b, t: (0, 0)),          # bias
            ],
            out_specs=pl.BlockSpec((Bb, Tb, Hp), lambda b, t: (b, t, 0)),
            scratch_shapes=[
                pltpu.VMEM((Bb, Hp), jnp.float32),        # carried hidden state
                pltpu.VMEM((Bb, Tb, Hp), jnp.float32),    # z / h stack (reused)
            ],
        ),
        compiler_params=pltpu.CompilerParams(
            # batch tiles independent -> parallel (megacore on v7x);
            # time blocks sequential (carried h) -> arbitrary, inner axis.
            dimension_semantics=("parallel", "arbitrary"),
            vmem_limit_bytes=vmem_limit,
        ),
    )(x_p, wih_t, whh_t, bias)

    return out_p[:B, :T, :H].astype(inputs.dtype)


def _reference(inputs, w_ih, w_hh, b_ih, b_hh, compute_dtype=jnp.bfloat16):
    """Pure-JAX reference of inputs + RNN(inputs)[0] using the same
    bf16-operand / f32-accumulate matmul arithmetic the kernel commits to."""
    B, T, H = inputs.shape
    wih_t = jnp.transpose(w_ih).astype(compute_dtype)
    whh_t = jnp.transpose(w_hh).astype(compute_dtype)
    bias = (b_ih + b_hh).astype(jnp.float32)

    def step(h, x_t):
        z = jnp.dot(x_t.astype(compute_dtype), wih_t,
                    preferred_element_type=jnp.float32)
        r = jnp.dot(h.astype(compute_dtype), whh_t,
                    preferred_element_type=jnp.float32)
        h_new = jnp.tanh(z + bias + r)
        return h_new, h_new

    xs = jnp.transpose(inputs.astype(jnp.float32), (1, 0, 2))
    _, ys = jax.lax.scan(step, jnp.zeros((B, H), jnp.float32), xs)
    return (inputs + jnp.transpose(ys, (1, 0, 2))).astype(inputs.dtype)


if __name__ == "__main__":
    B, T, H = 2, 8, 32   # batch, seq, hidden (input_size == hidden_size)

    key = jax.random.PRNGKey(0)
    k_x, k_wih, k_whh, k_bih, k_bhh = jax.random.split(key, 5)

    # Deterministic "PyTorch-like" init: U(-1/sqrt(H), 1/sqrt(H))
    bound = 1.0 / (H ** 0.5)
    inputs = jax.random.normal(k_x, (B, T, H), dtype=jnp.float32)
    w_ih = jax.random.uniform(k_wih, (H, H), jnp.float32, -bound, bound)
    w_hh = jax.random.uniform(k_whh, (H, H), jnp.float32, -bound, bound)
    b_ih = jax.random.uniform(k_bih, (H,), jnp.float32, -bound, bound)
    b_hh = jax.random.uniform(k_bhh, (H,), jnp.float32, -bound, bound)

    out = residual_rnn_forward(inputs, w_ih, w_hh, b_ih, b_hh)
    out = jax.block_until_ready(out)

    ref = _reference(inputs, w_ih, w_hh, b_ih, b_hh)
    assert out.shape == inputs.shape
    err = float(jnp.max(jnp.abs(out - ref)))
    # Tolerance covers tanh-implementation ULP differences compounding through
    # the recurrence plus rare bf16 rounding-boundary flips of h; structural
    # errors would be O(1).
    assert jnp.allclose(out, ref, atol=1e-2, rtol=1e-2), f"max abs err {err}"

    print("KERNEL_OK")
</pallas_src>

<mosaic_0001>
module attributes {stable_mosaic.version = 11 : i64} {
  func.func @_residual_rnn_kernel(%arg0: i32, %arg1: i32, %arg2: memref<8x8x128xf32, #tpu.memory_space<vmem>>, %arg3: memref<128x128xbf16, #tpu.memory_space<vmem>>, %arg4: memref<128x128xbf16, #tpu.memory_space<vmem>>, %arg5: memref<1x128xf32, #tpu.memory_space<vmem>>, %arg6: memref<8x8x128xf32, #tpu.memory_space<vmem>>, %arg7: memref<8x128xf32, #tpu.memory_space<vmem>>, %arg8: memref<8x8x128xf32, #tpu.memory_space<vmem>>) attributes {dimension_semantics = [#tpu.dimension_semantics<parallel>, #tpu.dimension_semantics<arbitrary>], iteration_bounds = array<i64: 1, 1>, scalar_prefetch = 0 : i64, scratch_operands = 2 : i64, tpu.core_type = #tpu.core_type<tc>, window_params = [{transform_indices = @transform_0, window_bounds = array<i64: 8, 8, 128>}, {pipeline_mode = #tpu.pipeline_mode<synchronous>, transform_indices = @transform_1, window_bounds = array<i64: 128, 128>}, {pipeline_mode = #tpu.pipeline_mode<synchronous>, transform_indices = @transform_2, window_bounds = array<i64: 128, 128>}, {pipeline_mode = #tpu.pipeline_mode<synchronous>, transform_indices = @transform_3, window_bounds = array<i64: 1, 128>}, {transform_indices = @transform_4, window_bounds = array<i64: 8, 8, 128>}]} {
    %c0_i32 = arith.constant 0 : i32
    %0 = arith.cmpi eq, %arg1, %c0_i32 : i32
    %1 = arith.extui %0 : i1 to i32
    %c0_i32_0 = arith.constant 0 : i32
    %2 = arith.cmpi ne, %1, %c0_i32_0 : i32
    scf.if %2 {
      %cst_74 = arith.constant 0.000000e+00 : f32
      %92 = vector.broadcast %cst_74 : f32 to vector<8x128xf32>
      %c0_75 = arith.constant 0 : index
      %c0_76 = arith.constant 0 : index
      %93 = vector.load %arg7[%c0_75, %c0_76] : memref<8x128xf32, #tpu.memory_space<vmem>>, vector<8x128xf32>
      tpu.vector_store %arg7[%c0_75, %c0_76], %92 {strides = array<i32>} : memref<8x128xf32, #tpu.memory_space<vmem>>, vector<8x128xf32>,
    } else {
    }
    %c0 = arith.constant 0 : index
    %c0_1 = arith.constant 0 : index
    %c0_2 = arith.constant 0 : index
    %3 = vector.load %arg2[%c0, %c0_1, %c0_2] : memref<8x8x128xf32, #tpu.memory_space<vmem>>, vector<8x8x128xf32>
    %4 = vector.shape_cast %3 : vector<8x8x128xf32> to vector<64x128xf32>
    %5 = arith.truncf %4 : vector<64x128xf32> to vector<64x128xbf16>
    %c0_3 = arith.constant 0 : index
    %c0_4 = arith.constant 0 : index
    %6 = vector.load %arg3[%c0_3, %c0_4] : memref<128x128xbf16, #tpu.memory_space<vmem>>, vector<128x128xbf16>
    %cst = arith.constant dense<0.000000e+00> : vector<64x128xf32>
    %7 = tpu.matmul %5, %6, %cst {dimension_numbers = #tpu.dot_dimension_numbers<[1], [0], [0], [1], [0, 0, 1, 1], [], []>} : vector<64x128xbf16>, vector<128x128xbf16>, vector<64x128xf32> -> vector<64x128xf32>
    %c0_5 = arith.constant 0 : index
    %c0_6 = arith.constant 0 : index
    %8 = vector.load %arg5[%c0_5, %c0_6] : memref<1x128xf32, #tpu.memory_space<vmem>>, vector<1x128xf32>
    %9 = vector.broadcast %8 : vector<1x128xf32> to vector<64x128xf32>
    %10 = arith.addf %7, %9 : vector<64x128xf32>
    %11 = vector.shape_cast %10 : vector<64x128xf32> to vector<8x8x128xf32>
    %c0_7 = arith.constant 0 : index
    %c0_8 = arith.constant 0 : index
    %c0_9 = arith.constant 0 : index
    %12 = vector.load %arg8[%c0_7, %c0_8, %c0_9] : memref<8x8x128xf32, #tpu.memory_space<vmem>>, vector<8x8x128xf32>
    tpu.vector_store %arg8[%c0_7, %c0_8, %c0_9], %11 {strides = array<i32>} : memref<8x8x128xf32, #tpu.memory_space<vmem>>, vector<8x8x128xf32>,
    %c0_10 = arith.constant 0 : index
    %c0_11 = arith.constant 0 : index
    %13 = vector.load %arg4[%c0_10, %c0_11] : memref<128x128xbf16, #tpu.memory_space<vmem>>, vector<128x128xbf16>
    %c0_12 = arith.constant 0 : index
    %c0_13 = arith.constant 0 : index
    %14 = vector.load %arg7[%c0_12, %c0_13] : memref<8x128xf32, #tpu.memory_space<vmem>>, vector<8x128xf32>
    %c0_14 = arith.constant 0 : index
    %c0_15 = arith.constant 0 : index
    %c0_16 = arith.constant 0 : index
    %15 = vector.load %arg8[%c0_14, %c0_15, %c0_16] : memref<8x8x128xf32, #tpu.memory_space<vmem>>, vector<8x1x128xf32>
    %16 = vector.shape_cast %15 : vector<8x1x128xf32> to vector<8x128xf32>
    %17 = arith.truncf %14 : vector<8x128xf32> to vector<8x128xbf16>
    %cst_17 = arith.constant dense<0.000000e+00> : vector<8x128xf32>
    %18 = tpu.matmul %17, %13, %cst_17 {dimension_numbers = #tpu.dot_dimension_numbers<[1], [0], [0], [1], [0, 0, 1, 1], [], []>} : vector<8x128xbf16>, vector<128x128xbf16>, vector<8x128xf32> -> vector<8x128xf32>
    %19 = arith.addf %16, %18 : vector<8x128xf32>
    %20 = math.tanh %19 : vector<8x128xf32>
    %c0_18 = arith.constant 0 : index
    %c0_19 = arith.constant 0 : index
    %c0_20 = arith.constant 0 : index
    %21 = vector.load %arg8[%c0_18, %c0_19, %c0_20] : memref<8x8x128xf32, #tpu.memory_space<vmem>>, vector<8x1x128xf32>
    %22 = vector.shape_cast %21 : vector<8x1x128xf32> to vector<8x128xf32>
    %23 = vector.shape_cast %20 : vector<8x128xf32> to vector<8x1x128xf32>
    tpu.vector_store %arg8[%c0_18, %c0_19, %c0_20], %23 {strides = array<i32>} : memref<8x8x128xf32, #tpu.memory_space<vmem>>, vector<8x1x128xf32>,
    %c0_21 = arith.constant 0 : index
    %c1 = arith.constant 1 : index
    %c0_22 = arith.constant 0 : index
    %24 = vector.load %arg8[%c0_21, %c1, %c0_22] : memref<8x8x128xf32, #tpu.memory_space<vmem>>, vector<8x1x128xf32>
    %25 = vector.shape_cast %24 : vector<8x1x128xf32> to vector<8x128xf32>
    %26 = arith.truncf %20 : vector<8x128xf32> to vector<8x128xbf16>
    %cst_23 = arith.constant dense<0.000000e+00> : vector<8x128xf32>
    %27 = tpu.matmul %26, %13, %cst_23 {dimension_numbers = #tpu.dot_dimension_numbers<[1], [0], [0], [1], [0, 0, 1, 1], [], []>} : vector<8x128xbf16>, vector<128x128xbf16>, vector<8x128xf32> -> vector<8x128xf32>
    %28 = arith.addf %25, %27 : vector<8x128xf32>
    %29 = math.tanh %28 : vector<8x128xf32>
    %c0_24 = arith.constant 0 : index
    %c1_25 = arith.constant 1 : index
    %c0_26 = arith.constant 0 : index
    %30 = vector.load %arg8[%c0_24, %c1_25, %c0_26] : memref<8x8x128xf32, #tpu.memory_space<vmem>>, vector<8x1x128xf32>
    %31 = vector.shape_cast %30 : vector<8x1x128xf32> to vector<8x128xf32>
    %32 = vector.shape_cast %29 : vector<8x128xf32> to vector<8x1x128xf32>
    tpu.vector_store %arg8[%c0_24, %c1_25, %c0_26], %32 {strides = array<i32>} : memref<8x8x128xf32, #tpu.memory_space<vmem>>, vector<8x1x128xf32>,
    %c0_27 = arith.constant 0 : index
    %c2 = arith.constant 2 : index
    %c0_28 = arith.constant 0 : index
    %33 = vector.load %arg8[%c0_27, %c2, %c0_28] : memref<8x8x128xf32, #tpu.memory_space<vmem>>, vector<8x1x128xf32>
    %34 = vector.shape_cast %33 : vector<8x1x128xf32> to vector<8x128xf32>
    %35 = arith.truncf %29 : vector<8x128xf32> to vector<8x128xbf16>
    %cst_29 = arith.constant dense<0.000000e+00> : vector<8x128xf32>
    %36 = tpu.matmul %35, %13, %cst_29 {dimension_numbers = #tpu.dot_dimension_numbers<[1], [0], [0], [1], [0, 0, 1, 1], [], []>} : vector<8x128xbf16>, vector<128x128xbf16>, vector<8x128xf32> -> vector<8x128xf32>
    %37 = arith.addf %34, %36 : vector<8x128xf32>
    %38 = math.tanh %37 : vector<8x128xf32>
    %c0_30 = arith.constant 0 : index
    %c2_31 = arith.constant 2 : index
    %c0_32 = arith.constant 0 : index
    %39 = vector.load %arg8[%c0_30, %c2_31, %c0_32] : memref<8x8x128xf32, #tpu.memory_space<vmem>>, vector<8x1x128xf32>
    %40 = vector.shape_cast %39 : vector<8x1x128xf32> to vector<8x128xf32>
    %41 = vector.shape_cast %38 : vector<8x128xf32> to vector<8x1x128xf32>
    tpu.vector_store %arg8[%c0_30, %c2_31, %c0_32], %41 {strides = array<i32>} : memref<8x8x128xf32, #tpu.memory_space<vmem>>, vector<8x1x128xf32>,
    %c0_33 = arith.constant 0 : index
    %c3 = arith.constant 3 : index
    %c0_34 = arith.constant 0 : index
    %42 = vector.load %arg8[%c0_33, %c3, %c0_34] : memref<8x8x128xf32, #tpu.memory_space<vmem>>, vector<8x1x128xf32>
    %43 = vector.shape_cast %42 : vector<8x1x128xf32> to vector<8x128xf32>
    %44 = arith.truncf %38 : vector<8x128xf32> to vector<8x128xbf16>
    %cst_35 = arith.constant dense<0.000000e+00> : vector<8x128xf32>
    %45 = tpu.matmul %44, %13, %cst_35 {dimension_numbers = #tpu.dot_dimension_numbers<[1], [0], [0], [1], [0, 0, 1, 1], [], []>} : vector<8x128xbf16>, vector<128x128xbf16>, vector<8x128xf32> -> vector<8x128xf32>
    %46 = arith.addf %43, %45 : vector<8x128xf32>
    %47 = math.tanh %46 : vector<8x128xf32>
    %c0_36 = arith.constant 0 : index
    %c3_37 = arith.constant 3 : index
    %c0_38 = arith.constant 0 : index
    %48 = vector.load %arg8[%c0_36, %c3_37, %c0_38] : memref<8x8x128xf32, #tpu.memory_space<vmem>>, vector<8x1x128xf32>
    %49 = vector.shape_cast %48 : vector<8x1x128xf32> to vector<8x128xf32>
    %50 = vector.shape_cast %47 : vector<8x128xf32> to vector<8x1x128xf32>
    tpu.vector_store %arg8[%c0_36, %c3_37, %c0_38], %50 {strides = array<i32>} : memref<8x8x128xf32, #tpu.memory_space<vmem>>, vector<8x1x128xf32>,
    %c0_39 = arith.constant 0 : index
    %c4 = arith.constant 4 : index
    %c0_40 = arith.constant 0 : index
    %51 = vector.load %arg8[%c0_39, %c4, %c0_40] : memref<8x8x128xf32, #tpu.memory_space<vmem>>, vector<8x1x128xf32>
    %52 = vector.shape_cast %51 : vector<8x1x128xf32> to vector<8x128xf32>
    %53 = arith.truncf %47 : vector<8x128xf32> to vector<8x128xbf16>
    %cst_41 = arith.constant dense<0.000000e+00> : vector<8x128xf32>
    %54 = tpu.matmul %53, %13, %cst_41 {dimension_numbers = #tpu.dot_dimension_numbers<[1], [0], [0], [1], [0, 0, 1, 1], [], []>} : vector<8x128xbf16>, vector<128x128xbf16>, vector<8x128xf32> -> vector<8x128xf32>
    %55 = arith.addf %52, %54 : vector<8x128xf32>
    %56 = math.tanh %55 : vector<8x128xf32>
    %c0_42 = arith.constant 0 : index
    %c4_43 = arith.constant 4 : index
    %c0_44 = arith.constant 0 : index
    %57 = vector.load %arg8[%c0_42, %c4_43, %c0_44] : memref<8x8x128xf32, #tpu.memory_space<vmem>>, vector<8x1x128xf32>
    %58 = vector.shape_cast %57 : vector<8x1x128xf32> to vector<8x128xf32>
    %59 = vector.shape_cast %56 : vector<8x128xf32> to vector<8x1x128xf32>
    tpu.vector_store %arg8[%c0_42, %c4_43, %c0_44], %59 {strides = array<i32>} : memref<8x8x128xf32, #tpu.memory_space<vmem>>, vector<8x1x128xf32>,
    %c0_45 = arith.constant 0 : index
    %c5 = arith.constant 5 : index
    %c0_46 = arith.constant 0 : index
    %60 = vector.load %arg8[%c0_45, %c5, %c0_46] : memref<8x8x128xf32, #tpu.memory_space<vmem>>, vector<8x1x128xf32>
    %61 = vector.shape_cast %60 : vector<8x1x128xf32> to vector<8x128xf32>
    %62 = arith.truncf %56 : vector<8x128xf32> to vector<8x128xbf16>
    %cst_47 = arith.constant dense<0.000000e+00> : vector<8x128xf32>
    %63 = tpu.matmul %62, %13, %cst_47 {dimension_numbers = #tpu.dot_dimension_numbers<[1], [0], [0], [1], [0, 0, 1, 1], [], []>} : vector<8x128xbf16>, vector<128x128xbf16>, vector<8x128xf32> -> vector<8x128xf32>
    %64 = arith.addf %61, %63 : vector<8x128xf32>
    %65 = math.tanh %64 : vector<8x128xf32>
    %c0_48 = arith.constant 0 : index
    %c5_49 = arith.constant 5 : index
    %c0_50 = arith.constant 0 : index
    %66 = vector.load %arg8[%c0_48, %c5_49, %c0_50] : memref<8x8x128xf32, #tpu.memory_space<vmem>>, vector<8x1x128xf32>
    %67 = vector.shape_cast %66 : vector<8x1x128xf32> to vector<8x128xf32>
    %68 = vector.shape_cast %65 : vector<8x128xf32> to vector<8x1x128xf32>
    tpu.vector_store %arg8[%c0_48, %c5_49, %c0_50], %68 {strides = array<i32>} : memref<8x8x128xf32, #tpu.memory_space<vmem>>, vector<8x1x128xf32>,
    %c0_51 = arith.constant 0 : index
    %c6 = arith.constant 6 : index
    %c0_52 = arith.constant 0 : index
    %69 = vector.load %arg8[%c0_51, %c6, %c0_52] : memref<8x8x128xf32, #tpu.memory_space<vmem>>, vector<8x1x128xf32>
    %70 = vector.shape_cast %69 : vector<8x1x128xf32> to vector<8x128xf32>
    %71 = arith.truncf %65 : vector<8x128xf32> to vector<8x128xbf16>
    %cst_53 = arith.constant dense<0.000000e+00> : vector<8x128xf32>
    %72 = tpu.matmul %71, %13, %cst_53 {dimension_numbers = #tpu.dot_dimension_numbers<[1], [0], [0], [1], [0, 0, 1, 1], [], []>} : vector<8x128xbf16>, vector<128x128xbf16>, vector<8x128xf32> -> vector<8x128xf32>
    %73 = arith.addf %70, %72 : vector<8x128xf32>
    %74 = math.tanh %73 : vector<8x128xf32>
    %c0_54 = arith.constant 0 : index
    %c6_55 = arith.constant 6 : index
    %c0_56 = arith.constant 0 : index
    %75 = vector.load %arg8[%c0_54, %c6_55, %c0_56] : memref<8x8x128xf32, #tpu.memory_space<vmem>>, vector<8x1x128xf32>
    %76 = vector.shape_cast %75 : vector<8x1x128xf32> to vector<8x128xf32>
    %77 = vector.shape_cast %74 : vector<8x128xf32> to vector<8x1x128xf32>
    tpu.vector_store %arg8[%c0_54, %c6_55, %c0_56], %77 {strides = array<i32>} : memref<8x8x128xf32, #tpu.memory_space<vmem>>, vector<8x1x128xf32>,
    %c0_57 = arith.constant 0 : index
    %c7 = arith.constant 7 : index
    %c0_58 = arith.constant 0 : index
    %78 = vector.load %arg8[%c0_57, %c7, %c0_58] : memref<8x8x128xf32, #tpu.memory_space<vmem>>, vector<8x1x128xf32>
    %79 = vector.shape_cast %78 : vector<8x1x128xf32> to vector<8x128xf32>
    %80 = arith.truncf %74 : vector<8x128xf32> to vector<8x128xbf16>
    %cst_59 = arith.constant dense<0.000000e+00> : vector<8x128xf32>
    %81 = tpu.matmul %80, %13, %cst_59 {dimension_numbers = #tpu.dot_dimension_numbers<[1], [0], [0], [1], [0, 0, 1, 1], [], []>} : vector<8x128xbf16>, vector<128x128xbf16>, vector<8x128xf32> -> vector<8x128xf32>
    %82 = arith.addf %79, %81 : vector<8x128xf32>
    %83 = math.tanh %82 : vector<8x128xf32>
    %c0_60 = arith.constant 0 : index
    %c7_61 = arith.constant 7 : index
    %c0_62 = arith.constant 0 : index
    %84 = vector.load %arg8[%c0_60, %c7_61, %c0_62] : memref<8x8x128xf32, #tpu.memory_space<vmem>>, vector<8x1x128xf32>
    %85 = vector.shape_cast %84 : vector<8x1x128xf32> to vector<8x128xf32>
    %86 = vector.shape_cast %83 : vector<8x128xf32> to vector<8x1x128xf32>
    tpu.vector_store %arg8[%c0_60, %c7_61, %c0_62], %86 {strides = array<i32>} : memref<8x8x128xf32, #tpu.memory_space<vmem>>, vector<8x1x128xf32>,
    %c0_63 = arith.constant 0 : index
    %c0_64 = arith.constant 0 : index
    %87 = vector.load %arg7[%c0_63, %c0_64] : memref<8x128xf32, #tpu.memory_space<vmem>>, vector<8x128xf32>
    tpu.vector_store %arg7[%c0_63, %c0_64], %83 {strides = array<i32>} : memref<8x128xf32, #tpu.memory_space<vmem>>, vector<8x128xf32>,
    %c0_65 = arith.constant 0 : index
    %c0_66 = arith.constant 0 : index
    %c0_67 = arith.constant 0 : index
    %88 = vector.load %arg2[%c0_65, %c0_66, %c0_67] : memref<8x8x128xf32, #tpu.memory_space<vmem>>, vector<8x8x128xf32>
    %c0_68 = arith.constant 0 : index
    %c0_69 = arith.constant 0 : index
    %c0_70 = arith.constant 0 : index
    %89 = vector.load %arg8[%c0_68, %c0_69, %c0_70] : memref<8x8x128xf32, #tpu.memory_space<vmem>>, vector<8x8x128xf32>
    %90 = arith.addf %88, %89 : vector<8x8x128xf32>
    %c0_71 = arith.constant 0 : index
    %c0_72 = arith.constant 0 : index
    %c0_73 = arith.constant 0 : index
    %91 = vector.load %arg6[%c0_71, %c0_72, %c0_73] : memref<8x8x128xf32, #tpu.memory_space<vmem>>, vector<8x8x128xf32>
    tpu.vector_store %arg6[%c0_71, %c0_72, %c0_73], %90 {strides = array<i32>} : memref<8x8x128xf32, #tpu.memory_space<vmem>>, vector<8x8x128xf32>,
    return
  }
  func.func @transform_0(%arg0: i32, %arg1: i32) -> (i32, i32, i32) {
    %c0_i32 = arith.constant 0 : i32
    %c0_i32_0 = arith.constant 0 : i32
    return %arg0, %arg1, %c0_i32 : i32, i32, i32
  }
  func.func @transform_1(%arg0: i32, %arg1: i32) -> (i32, i32) {
    %c0_i32 = arith.constant 0 : i32
    %c0_i32_0 = arith.constant 0 : i32
    %c0_i32_1 = arith.constant 0 : i32
    return %c0_i32, %c0_i32_0 : i32, i32
  }
  func.func @transform_2(%arg0: i32, %arg1: i32) -> (i32, i32) {
    %c0_i32 = arith.constant 0 : i32
    %c0_i32_0 = arith.constant 0 : i32
    %c0_i32_1 = arith.constant 0 : i32
    return %c0_i32, %c0_i32_0 : i32, i32
  }
  func.func @transform_3(%arg0: i32, %arg1: i32) -> (i32, i32) {
    %c0_i32 = arith.constant 0 : i32
    %c0_i32_0 = arith.constant 0 : i32
    %c0_i32_1 = arith.constant 0 : i32
    return %c0_i32, %c0_i32_0 : i32, i32
  }
  func.func @transform_4(%arg0: i32, %arg1: i32) -> (i32, i32, i32) {
    %c0_i32 = arith.constant 0 : i32
    %c0_i32_0 = arith.constant 0 : i32
    return %arg0, %arg1, %c0_i32 : i32, i32, i32
  }
}

</mosaic_0001>

<llo_original>
// kernel: tpu_custom_call.1
$region0: #{tpu_custom_call.1}
  #allocation0 [shape = 'u32[]', space=smem, size = 0x4, offset = 0x4, fixed_abs, tag = 'smem constant byte address 0x4 - core index']
  #allocation1 [shape = 'u32[144,128]{1,0:T(1,128)}', space=vmem, size = 0x12000, scoped, tag = 'internal scratch']
  #allocation2 [shape = 'f32[8,128]{1,0:T(8,128)}', space=vmem, size = 0x1000, scoped, tag = 'scratch operand']
  #allocation3 [shape = 'f32[8,8,128]{2,1,0:T(8,128)}', space=vmem, size = 0x8000, scoped, tag = 'scratch operand']
  %s0 = inlined_call_operand.hbm [shape: f32[8,8,128], index: 0, kind: input, shape index: {}]
  %s1 = inlined_call_operand.hbm [shape: bf16[128,128], index: 1, kind: input, shape index: {}]
  %s2 = inlined_call_operand.hbm [shape: bf16[128,128], index: 2, kind: input, shape index: {}]
  %s3 = inlined_call_operand.vmem [shape: f32[1,128], index: 3, kind: input, shape index: {}]
  %s4 = inlined_call_operand.hbm [shape: f32[8,8,128], index: 4, kind: output, shape index: {}]
  %s5 = sld [smem:[#allocation0]]
  $region42: #{tpu_custom_call.1} parent=0
    _
  %s7 = ssub.s32 1, %s5
  %s8 = scalar_select 0, %s7, %s5
  $region1: #{tpu_custom_call.1} parent=0
    #allocation4 [shape = 'u8[32768]{0}', space=vmem, size = 0x8000, scoped, tag = 'input window, operand 0, single buffered']
    #allocation5 [shape = 's32[1]{0}', space=sflag, size = 0x4, scoped, tag = 'scoped memory for tpu_custom_call.1']
    #allocation6 [shape = 's32[1]{0}', space=sflag, size = 0x4, scoped, tag = 'scoped memory for tpu_custom_call.1']
    #allocation7 [shape = 'u8[32768]{0}', space=vmem, size = 0x8000, scoped, tag = 'input window, operand 1, single buffered']
    #allocation8 [shape = 's32[1]{0}', space=sflag, size = 0x4, scoped, tag = 'scoped memory for tpu_custom_call.1']
    #allocation9 [shape = 'u8[32768]{0}', space=vmem, size = 0x8000, scoped, tag = 'input window, operand 2, single buffered']
    #allocation10 [shape = 'u8[32768]{0}', space=vmem, size = 0x8000, scoped, tag = 'output window, operand 0, single buffered']
    %9 = vsyncpa [#allocation5], 0
    %10 = vsyncpa [#allocation8], 0
    %11 = vsyncpa [#allocation6], 0
    // Predicated region
    $region2: #{tpu_custom_call.1} parent=1 // pred_check
      _
    $region3: #{tpu_custom_call.1} parent=1 // pred_check_branch
      %13 = sbr.rel (0) target = $region5
    $region4: #{tpu_custom_call.1} parent=1 // pred_region
      %s15 = ssub.s32 1024, 1024
      %16 = vsyncadd [#allocation5], %s15
      %s17 = sshll.u32 [#allocation4], 4
      %s18 = int_to_ptr.vmem [resolvable:$true] %s17
      %23 = dma.hbm_to_vmem [thread:$0]  %s0, 1024, %s18, [#allocation5], 128, 128, 8
    $region5: #{tpu_custom_call.1} parent=1 // pred_fallthru
      _
    // Predicated region
    $region6: #{tpu_custom_call.1} parent=1 // pred_check
      _
    $region7: #{tpu_custom_call.1} parent=1 // pred_check_branch
      %25 = sbr.rel (0) target = $region9
    $region8: #{tpu_custom_call.1} parent=1 // pred_region
      %s27 = ssub.s32 1024, 1024
      %28 = vsyncadd [#allocation8], %s27
      %s29 = sshll.u32 [#allocation7], 4
      %s30 = int_to_ptr.vmem [resolvable:$true] %s29
      %35 = dma.hbm_to_vmem [thread:$0]  %s1, 1024, %s30, [#allocation8], 64, 64, 4
    $region9: #{tpu_custom_call.1} parent=1 // pred_fallthru
      _
    // Predicated region
    $region10: #{tpu_custom_call.1} parent=1 // pred_check
      _
    $region11: #{tpu_custom_call.1} parent=1 // pred_check_branch
      %37 = sbr.rel (0) target = $region13
    $region12: #{tpu_custom_call.1} parent=1 // pred_region
      %s39 = ssub.s32 1024, 1024
      %40 = vsyncadd [#allocation8], %s39
      %s41 = sshll.u32 [#allocation9], 4
      %s42 = int_to_ptr.vmem [resolvable:$true] %s41
      %47 = dma.hbm_to_vmem [thread:$0]  %s2, 1024, %s42, [#allocation8], 64, 64, 4
    $region13: #{tpu_custom_call.1} parent=1 // pred_fallthru
      _
    // Predicated region
    $region14: #{tpu_custom_call.1} parent=1 // pred_check
      _
    $region15: #{tpu_custom_call.1} parent=1 // pred_check_branch
      %49 = sbr.rel (0) target = $region17
    $region16: #{tpu_custom_call.1} parent=1 // pred_region
      _
    $region17: #{tpu_custom_call.1} parent=1 // pred_fallthru
      _
    // Predicated region
    $region18: #{tpu_custom_call.1} parent=1 // pred_check
      _
    $region19: #{tpu_custom_call.1} parent=1 // pred_check_branch
      %51 = sbr.rel (0) target = $region21
    $region20: #{tpu_custom_call.1} parent=1 // pred_region
      %52 = dma.done [#allocation5], 1024
    $region21: #{tpu_custom_call.1} parent=1 // pred_fallthru
      _
    // Predicated region
    $region22: #{tpu_custom_call.1} parent=1 // pred_check
      _
    $region23: #{tpu_custom_call.1} parent=1 // pred_check_branch
      %54 = sbr.rel (0) target = $region25
    $region24: #{tpu_custom_call.1} parent=1 // pred_region
      %55 = dma.done [#allocation8], 1024
    $region25: #{tpu_custom_call.1} parent=1 // pred_fallthru
      _
    // Predicated region
    $region26: #{tpu_custom_call.1} parent=1 // pred_check
      _
    $region27: #{tpu_custom_call.1} parent=1 // pred_check_branch
      %57 = sbr.rel (0) target = $region29
    $region28: #{tpu_custom_call.1} parent=1 // pred_region
      %58 = dma.done [#allocation8], 1024
    $region29: #{tpu_custom_call.1} parent=1 // pred_fallthru
      _
    %p60 = scmp.eq.s32.totalorder 0, 0
    // Predicated region
    $region30: #{tpu_custom_call.1} parent=1 // pred_check
      %p61 = pneg %p60
    $region31: #{tpu_custom_call.1} parent=1 // pred_check_branch
      %63 = sbr.rel (%p61) target = $region33
    $region32: #{tpu_custom_call.1} parent=1 // pred_region
      %64 = vst [vmem:[#allocation2] sm:$0xff] 0.0
    $region33: #{tpu_custom_call.1} parent=1 // pred_fallthru
      _
    %v65 = vld [vmem:[#allocation4] sm:$0xff]
    %v66 = vld [vmem:[#allocation4 + $0x8] sm:$0xff]
    %v67 = vld [vmem:[#allocation4 + $0x10] sm:$0xff]
    %v68 = vld [vmem:[#allocation4 + $0x18] sm:$0xff]
    %v69 = vld [vmem:[#allocation4 + $0x20] sm:$0xff]
    %v70 = vld [vmem:[#allocation4 + $0x28] sm:$0xff]
    %v71 = vld [vmem:[#allocation4 + $0x30] sm:$0xff]
    %v72 = vld [vmem:[#allocation4 + $0x38] sm:$0xff]
    %v73 = vpack.c.bf16 %v66, %v65
    %v74 = vpack.c.bf16 %v68, %v67
    %v75 = vpack.c.bf16 %v70, %v69
    %v76 = vpack.c.bf16 %v72, %v71
    %v77 = vld [vmem:[#allocation7] sm:$0xf]
    %v78 = vld [vmem:[#allocation7 + $0x4] sm:$0xf]
    %v79 = vld [vmem:[#allocation7 + $0x8] sm:$0xf]
    %v80 = vld [vmem:[#allocation7 + $0xc] sm:$0xf]
    %v81 = vld [vmem:[#allocation7 + $0x10] sm:$0xf]
    %v82 = vld [vmem:[#allocation7 + $0x14] sm:$0xf]
    %v83 = vld [vmem:[#allocation7 + $0x18] sm:$0xf]
    %v84 = vld [vmem:[#allocation7 + $0x1c] sm:$0xf]
    %v85 = vld [vmem:[#allocation7 + $0x20] sm:$0xf]
    %v86 = vld [vmem:[#allocation7 + $0x24] sm:$0xf]
    %v87 = vld [vmem:[#allocation7 + $0x28] sm:$0xf]
    %v88 = vld [vmem:[#allocation7 + $0x2c] sm:$0xf]
    %v89 = vld [vmem:[#allocation7 + $0x30] sm:$0xf]
    %v90 = vld [vmem:[#allocation7 + $0x34] sm:$0xf]
    %v91 = vld [vmem:[#allocation7 + $0x38] sm:$0xf]
    %v92 = vld [vmem:[#allocation7 + $0x3c] sm:$0xf]
    %v93 = vld [vmem:[%s3] sm:$0x1]
    %v95 = vlaneseq
    %v96 = vshrl.u32 %v95, 7
    %v97 = vsub.s32 0, %v96
    %v98 = vrot.slane %v93, %v97
    %v116 = vunpack.c.l.b16 %v77
    %v117 = vunpack.c.l.b16 %v78
    %v118 = vunpack.c.l.b16 %v79
    %v119 = vunpack.c.l.b16 %v80
    %v120 = vunpack.c.l.b16 %v81
    %v121 = vunpack.c.l.b16 %v82
    %v122 = vunpack.c.l.b16 %v83
    %v123 = vunpack.c.l.b16 %v84
    %v124 = vunpack.c.l.b16 %v85
    %v125 = vunpack.c.l.b16 %v86
    %v126 = vunpack.c.l.b16 %v87
    %v127 = vunpack.c.l.b16 %v88
    %v128 = vunpack.c.l.b16 %v89
    %v129 = vunpack.c.l.b16 %v90
    %v130 = vunpack.c.l.b16 %v91
    %v131 = vunpack.c.l.b16 %v92
    %v132 = vpack.c.b16 %v117, %v116
    %v133 = vpack.c.b16 %v119, %v118
    %v134 = vpack.c.b16 %v121, %v120
    %v135 = vpack.c.b16 %v123, %v122
    %v136 = vpack.c.b16 %v125, %v124
    %v137 = vpack.c.b16 %v127, %v126
    %v138 = vpack.c.b16 %v129, %v128
    %v139 = vpack.c.b16 %v131, %v130
    %148 = vmatprep.subr.bf16.mxu0 0
    %149 = vmatpush1.bf16.msra.mxu0 %v132
    %150 = vmatprep.subr.bf16.mxu0 0
    %151 = vmatpush1.bf16.msra.mxu0 %v133
    %152 = vmatprep.subr.bf16.mxu0 0
    %153 = vmatpush1.bf16.msra.mxu0 %v134
    %154 = vmatprep.subr.bf16.mxu0 0
    %155 = vmatpush1.bf16.msra.mxu0 %v135
    %156 = vmatprep.subr.bf16.mxu0 0
    %157 = vmatpush1.bf16.msra.mxu0 %v136
    %158 = vmatprep.subr.bf16.mxu0 0
    %159 = vmatpush1.bf16.msra.mxu0 %v137
    %160 = vmatprep.subr.bf16.mxu0 0
    %161 = vmatpush1.bf16.msra.mxu0 %v138
    %162 = vmatprep.subr.bf16.mxu0 0
    %163 = vmatpush1.bf16.msra.mxu0 %v139
    %164 = vmatprep.subr.bf16.mxu0 0
    %165 = vmatpush1.bf16.msra.mxu0 0
    %166 = vmatprep.subr.bf16.mxu0 0
    %167 = vmatpush1.bf16.msra.mxu0 0
    %168 = vmatprep.subr.bf16.mxu0 0
    %169 = vmatpush1.bf16.msra.mxu0 0
    %170 = vmatprep.subr.bf16.mxu0 0
    %171 = vmatpush1.bf16.msra.mxu0 0
    %172 = vmatprep.subr.bf16.mxu0 0
    %173 = vmatpush1.bf16.msra.mxu0 0
    %174 = vmatprep.subr.bf16.mxu0 0
    %175 = vmatpush1.bf16.msra.mxu0 0
    %176 = vmatprep.subr.bf16.mxu0 0
    %177 = vmatpush1.bf16.msra.mxu0 0
    %178 = vmatprep.subr.bf16.mxu0 0
    %179 = vmatpush1.bf16.msra.mxu0 0
    %180 = vmatprep.mubr.bf16.mxu0 0
    %181 = vmatmul.mubr.bf16.gmra.mrb[0].mxu0 %v73
    %v182 = vpop.f32.mrb[0].mxu0
    %v183 = vadd.f32 %v98, %v182
    %v184 = vpop.f32.mrb[0].mxu0
    %v185 = vpop.f32.mrb[0].mxu0
    %v186 = vadd.f32 %v98, %v185
    %v187 = vpop.f32.mrb[0].mxu0
    %188 = vmatprep.mubr.bf16.mxu0 0
    %189 = vmatmul.mubr.bf16.gmra.mrb[0].mxu0 %v74
    %v190 = vpop.f32.mrb[0].mxu0
    %v191 = vadd.f32 %v98, %v190
    %v192 = vpop.f32.mrb[0].mxu0
    %v193 = vpop.f32.mrb[0].mxu0
    %v194 = vadd.f32 %v98, %v193
    %v195 = vpop.f32.mrb[0].mxu0
    %196 = vmatprep.mubr.bf16.mxu0 0
    %197 = vmatmul.mubr.bf16.gmra.mrb[0].mxu0 %v75
    %v198 = vpop.f32.mrb[0].mxu0
    %v199 = vadd.f32 %v98, %v198
    %v200 = vpop.f32.mrb[0].mxu0
    %v201 = vpop.f32.mrb[0].mxu0
    %v202 = vadd.f32 %v98, %v201
    %v203 = vpop.f32.mrb[0].mxu0
    %204 = vmatprep.mubr.bf16.mxu0 0
    %205 = vmatmul.mubr.bf16.gmra.mrb[0].mxu0 %v76
    %v206 = vpop.f32.mrb[0].mxu0
    %v207 = vadd.f32 %v98, %v206
    %v208 = vpop.f32.mrb[0].mxu0
    %v209 = vpop.f32.mrb[0].mxu0
    %v210 = vadd.f32 %v98, %v209
    %v211 = vpop.f32.mrb[0].mxu0
    %212 = vdwg.mxu0
    %213 = vst [vmem:[#allocation3] sm:$0xff] %v183
    %214 = vst [vmem:[#allocation3 + $0x8] sm:$0xff] %v186
    %215 = vst [vmem:[#allocation3 + $0x10] sm:$0xff] %v191
    %216 = vst [vmem:[#allocation3 + $0x18] sm:$0xff] %v194
    %217 = vst [vmem:[#allocation3 + $0x20] sm:$0xff] %v199
    %218 = vst [vmem:[#allocation3 + $0x28] sm:$0xff] %v202
    %219 = vst [vmem:[#allocation3 + $0x30] sm:$0xff] %v207
    %220 = vst [vmem:[#allocation3 + $0x38] sm:$0xff] %v210
    %v221 = vld [vmem:[#allocation9] sm:$0xf]
    %v222 = vld [vmem:[#allocation9 + $0x4] sm:$0xf]
    %v223 = vld [vmem:[#allocation9 + $0x8] sm:$0xf]
    %v224 = vld [vmem:[#allocation9 + $0xc] sm:$0xf]
    %v225 = vld [vmem:[#allocation9 + $0x10] sm:$0xf]
    %v226 = vld [vmem:[#allocation9 + $0x14] sm:$0xf]
    %v227 = vld [vmem:[#allocation9 + $0x18] sm:$0xf]
    %v228 = vld [vmem:[#allocation9 + $0x1c] sm:$0xf]
    %v229 = vld [vmem:[#allocation9 + $0x20] sm:$0xf]
    %v230 = vld [vmem:[#allocation9 + $0x24] sm:$0xf]
    %v231 = vld [vmem:[#allocation9 + $0x28] sm:$0xf]
    %v232 = vld [vmem:[#allocation9 + $0x2c] sm:$0xf]
    %v233 = vld [vmem:[#allocation9 + $0x30] sm:$0xf]
    %v234 = vld [vmem:[#allocation9 + $0x34] sm:$0xf]
    %v235 = vld [vmem:[#allocation9 + $0x38] sm:$0xf]
    %v236 = vld [vmem:[#allocation9 + $0x3c] sm:$0xf]
    %v237 = vld [vmem:[#allocation2] sm:$0xff]
    %v238 = vld [vmem:[#allocation3] sm:$0x1]
    %v239 = vld [vmem:[#allocation3 + $0x8] sm:$0x1]
    %v240 = vld [vmem:[#allocation3 + $0x10] sm:$0x1]
    %v241 = vld [vmem:[#allocation3 + $0x18] sm:$0x1]
    %v242 = vld [vmem:[#allocation3 + $0x20] sm:$0x1]
    %v243 = vld [vmem:[#allocation3 + $0x28] sm:$0x1]
    %v244 = vld [vmem:[#allocation3 + $0x30] sm:$0x1]
    %v245 = vld [vmem:[#allocation3 + $0x38] sm:$0x1]
    %v246 = vpack.c.bf16 %v237, %v237
    %v263 = vunpack.c.l.b16 %v221
    %v264 = vunpack.c.l.b16 %v222
    %v265 = vunpack.c.l.b16 %v223
    %v266 = vunpack.c.l.b16 %v224
    %v267 = vunpack.c.l.b16 %v225
    %v268 = vunpack.c.l.b16 %v226
    %v269 = vunpack.c.l.b16 %v227
    %v270 = vunpack.c.l.b16 %v228
    %v271 = vunpack.c.l.b16 %v229
    %v272 = vunpack.c.l.b16 %v230
    %v273 = vunpack.c.l.b16 %v231
    %v274 = vunpack.c.l.b16 %v232
    %v275 = vunpack.c.l.b16 %v233
    %v276 = vunpack.c.l.b16 %v234
    %v277 = vunpack.c.l.b16 %v235
    %v278 = vunpack.c.l.b16 %v236
    %v279 = vpack.c.b16 %v264, %v263
    %v280 = vpack.c.b16 %v266, %v265
    %v281 = vpack.c.b16 %v268, %v267
    %v282 = vpack.c.b16 %v270, %v269
    %v283 = vpack.c.b16 %v272, %v271
    %v284 = vpack.c.b16 %v274, %v273
    %v285 = vpack.c.b16 %v276, %v275
    %v286 = vpack.c.b16 %v278, %v277
    %295 = vmatprep.subr.bf16.mxu0 0
    %296 = vmatpush1.bf16.msra.mxu0 %v279
    %297 = vmatprep.subr.bf16.mxu0 0
    %298 = vmatpush1.bf16.msra.mxu0 %v280
    %299 = vmatprep.subr.bf16.mxu0 0
    %300 = vmatpush1.bf16.msra.mxu0 %v281
    %301 = vmatprep.subr.bf16.mxu0 0
    %302 = vmatpush1.bf16.msra.mxu0 %v282
    %303 = vmatprep.subr.bf16.mxu0 0
    %304 = vmatpush1.bf16.msra.mxu0 %v283
    %305 = vmatprep.subr.bf16.mxu0 0
    %306 = vmatpush1.bf16.msra.mxu0 %v284
    %307 = vmatprep.subr.bf16.mxu0 0
    %308 = vmatpush1.bf16.msra.mxu0 %v285
    %309 = vmatprep.subr.bf16.mxu0 0
    %310 = vmatpush1.bf16.msra.mxu0 %v286
    %311 = vmatprep.subr.bf16.mxu0 0
    %312 = vmatpush1.bf16.msra.mxu0 0
    %313 = vmatprep.subr.bf16.mxu0 0
    %314 = vmatpush1.bf16.msra.mxu0 0
    %315 = vmatprep.subr.bf16.mxu0 0
    %316 = vmatpush1.bf16.msra.mxu0 0
    %317 = vmatprep.subr.bf16.mxu0 0
    %318 = vmatpush1.bf16.msra.mxu0 0
    %319 = vmatprep.subr.bf16.mxu0 0
    %320 = vmatpush1.bf16.msra.mxu0 0
    %321 = vmatprep.subr.bf16.mxu0 0
    %322 = vmatpush1.bf16.msra.mxu0 0
    %323 = vmatprep.subr.bf16.mxu0 0
    %324 = vmatpush1.bf16.msra.mxu0 0
    %325 = vmatprep.subr.bf16.mxu0 0
    %326 = vmatpush1.bf16.msra.mxu0 0
    %327 = vmatprep.mubr.bf16.mxu0 0
    %328 = vmatmul.mubr.bf16.gmra.mrb[0].mxu0 %v246
    %v329 = vpop.f32.mrb[0].mxu0
    %v330 = vadd.f32 0.0, %v329
    %v331 = vpop.f32.mrb[0].mxu0
    %v332 = vpop.f32.mrb[0].mxu0
    %v333 = vpop.f32.mrb[0].mxu0
    %334 = vdwg.mxu0
    %v336 = vrot.slane %v330, 1
    %v337 = vrot.slane %v330, 2
    %v338 = vrot.slane %v330, 3
    %v339 = vrot.slane %v330, 4
    %v340 = vrot.slane %v330, 5
    %v341 = vrot.slane %v330, 6
    %v342 = vrot.slane %v330, 7
    %v351 = vadd.f32 %v238, %v330
    %v352 = vadd.f32 %v239, %v336
    %v353 = vadd.f32 %v240, %v337
    %v354 = vadd.f32 %v241, %v338
    %v355 = vadd.f32 %v242, %v339
    %v356 = vadd.f32 %v243, %v340
    %v357 = vadd.f32 %v244, %v341
    %v358 = vadd.f32 %v245, %v342
    %v359 = vtanh.pop %v351
    %v360 = vtanh.pop %v352
    %v361 = vtanh.pop %v353
    %v362 = vtanh.pop %v354
    %v363 = vtanh.pop %v355
    %v364 = vtanh.pop %v356
    %v365 = vtanh.pop %v357
    %v366 = vtanh.pop %v358
    %367 = vst [vmem:[#allocation3] sm:$0x1] %v359
    %368 = vst [vmem:[#allocation3 + $0x8] sm:$0x1] %v360
    %369 = vst [vmem:[#allocation3 + $0x10] sm:$0x1] %v361
    %370 = vst [vmem:[#allocation3 + $0x18] sm:$0x1] %v362
    %371 = vst [vmem:[#allocation3 + $0x20] sm:$0x1] %v363
    %372 = vst [vmem:[#allocation3 + $0x28] sm:$0x1] %v364
    %373 = vst [vmem:[#allocation3 + $0x30] sm:$0x1] %v365
    %374 = vst [vmem:[#allocation3 + $0x38] sm:$0x1] %v366
    %v375 = vld [vmem:[#allocation3 + $0x1] sm:$0x1]
    %v376 = vld [vmem:[#allocation3 + $0x9] sm:$0x1]
    %v377 = vld [vmem:[#allocation3 + $0x11] sm:$0x1]
    %v378 = vld [vmem:[#allocation3 + $0x19] sm:$0x1]
    %v379 = vld [vmem:[#allocation3 + $0x21] sm:$0x1]
    %v380 = vld [vmem:[#allocation3 + $0x29] sm:$0x1]
    %v381 = vld [vmem:[#allocation3 + $0x31] sm:$0x1]
    %v382 = vld [vmem:[#allocation3 + $0x39] sm:$0x1]
    %v383 = vpack.c.bf16 %v359, %v359
    %v384 = vpack.c.bf16 %v360, %v360
    %v385 = vpack.c.bf16 %v361, %v361
    %v386 = vpack.c.bf16 %v362, %v362
    %v387 = vpack.c.bf16 %v363, %v363
    %v388 = vpack.c.bf16 %v364, %v364
    %v389 = vpack.c.bf16 %v365, %v365
    %v390 = vpack.c.bf16 %v366, %v366
    %v399 = vunpack.c.l.b16 %v383
    %v400 = vunpack.c.l.b16 %v384
    %v401 = vunpack.c.l.b16 %v385
    %v402 = vunpack.c.l.b16 %v386
    %v403 = vunpack.c.l.b16 %v387
    %v404 = vunpack.c.l.b16 %v388
    %v405 = vunpack.c.l.b16 %v389
    %v406 = vunpack.c.l.b16 %v390
    %v407 = vrot.slane %v400, 7
    %vm408 = vcmask 1041409
    %v409 = vsel %vm408, %v407, %v399
    %v410 = vrot.slane %v401, 6
    %vm411 = vcmask 1042434
    %v412 = vsel %vm411, %v410, %v409
    %v413 = vrot.slane %v402, 5
    %vm414 = vcmask 1043459
    %v415 = vsel %vm414, %v413, %v412
    %v416 = vrot.slane %v403, 4
    %vm417 = vcmask 1044484
    %v418 = vsel %vm417, %v416, %v415
    %v419 = vrot.slane %v404, 3
    %vm420 = vcmask 1045509
    %v421 = vsel %vm420, %v419, %v418
    %v422 = vrot.slane %v405, 2
    %vm423 = vcmask 1046534
    %v424 = vsel %vm423, %v422, %v421
    %v425 = vrot.slane %v406, 1
    %vm426 = vcmask 1047559
    %v427 = vsel %vm426, %v425, %v424
    %v428 = vpack.c.b16 %v427, %v427
    %430 = vmatprep.subr.bf16.mxu0 0
    %431 = vmatpush1.bf16.msra.mxu0 %v279
    %432 = vmatprep.subr.bf16.mxu0 0
    %433 = vmatpush1.bf16.msra.mxu0 %v280
    %434 = vmatprep.subr.bf16.mxu0 0
    %435 = vmatpush1.bf16.msra.mxu0 %v281
    %436 = vmatprep.subr.bf16.mxu0 0
    %437 = vmatpush1.bf16.msra.mxu0 %v282
    %438 = vmatprep.subr.bf16.mxu0 0
    %439 = vmatpush1.bf16.msra.mxu0 %v283
    %440 = vmatprep.subr.bf16.mxu0 0
    %441 = vmatpush1.bf16.msra.mxu0 %v284
    %442 = vmatprep.subr.bf16.mxu0 0
    %443 = vmatpush1.bf16.msra.mxu0 %v285
    %444 = vmatprep.subr.bf16.mxu0 0
    %445 = vmatpush1.bf16.msra.mxu0 %v286
    %446 = vmatprep.subr.bf16.mxu0 0
    %447 = vmatpush1.bf16.msra.mxu0 0
    %448 = vmatprep.subr.bf16.mxu0 0
    %449 = vmatpush1.bf16.msra.mxu0 0
    %450 = vmatprep.subr.bf16.mxu0 0
    %451 = vmatpush1.bf16.msra.mxu0 0
    %452 = vmatprep.subr.bf16.mxu0 0
    %453 = vmatpush1.bf16.msra.mxu0 0
    %454 = vmatprep.subr.bf16.mxu0 0
    %455 = vmatpush1.bf16.msra.mxu0 0
    %456 = vmatprep.subr.bf16.mxu0 0
    %457 = vmatpush1.bf16.msra.mxu0 0
    %458 = vmatprep.subr.bf16.mxu0 0
    %459 = vmatpush1.bf16.msra.mxu0 0
    %460 = vmatprep.subr.bf16.mxu0 0
    %461 = vmatpush1.bf16.msra.mxu0 0
    %462 = vmatprep.mubr.bf16.mxu0 0
    %463 = vmatmul.mubr.bf16.gmra.mrb[0].mxu0 %v428
    %v464 = vpop.f32.mrb[0].mxu0
    %v465 = vadd.f32 0.0, %v464
    %v466 = vpop.f32.mrb[0].mxu0
    %v467 = vpop.f32.mrb[0].mxu0
    %v468 = vpop.f32.mrb[0].mxu0
    %469 = vdwg.mxu0
    %v471 = vrot.slane %v465, 1
    %v472 = vrot.slane %v465, 2
    %v473 = vrot.slane %v465, 3
    %v474 = vrot.slane %v465, 4
    %v475 = vrot.slane %v465, 5
    %v476 = vrot.slane %v465, 6
    %v477 = vrot.slane %v465, 7
    %v486 = vadd.f32 %v375, %v465
    %v487 = vadd.f32 %v376, %v471
    %v488 = vadd.f32 %v377, %v472
    %v489 = vadd.f32 %v378, %v473
    %v490 = vadd.f32 %v379, %v474
    %v491 = vadd.f32 %v380, %v475
    %v492 = vadd.f32 %v381, %v476
    %v493 = vadd.f32 %v382, %v477
    %v494 = vtanh.pop %v486
    %v495 = vtanh.pop %v487
    %v496 = vtanh.pop %v488
    %v497 = vtanh.pop %v489
    %v498 = vtanh.pop %v490
    %v499 = vtanh.pop %v491
    %v500 = vtanh.pop %v492
    %v501 = vtanh.pop %v493
    %502 = vst [vmem:[#allocation3 + $0x1] sm:$0x1] %v494
    %503 = vst [vmem:[#allocation3 + $0x9] sm:$0x1] %v495
    %504 = vst [vmem:[#allocation3 + $0x11] sm:$0x1] %v496
    %505 = vst [vmem:[#allocation3 + $0x19] sm:$0x1] %v497
    %506 = vst [vmem:[#allocation3 + $0x21] sm:$0x1] %v498
    %507 = vst [vmem:[#allocation3 + $0x29] sm:$0x1] %v499
    %508 = vst [vmem:[#allocation3 + $0x31] sm:$0x1] %v500
    %509 = vst [vmem:[#allocation3 + $0x39] sm:$0x1] %v501
    %v510 = vld [vmem:[#allocation3 + $0x2] sm:$0x1]
    %v511 = vld [vmem:[#allocation3 + $0xa] sm:$0x1]
    %v512 = vld [vmem:[#allocation3 + $0x12] sm:$0x1]
    %v513 = vld [vmem:[#allocation3 + $0x1a] sm:$0x1]
    %v514 = vld [vmem:[#allocation3 + $0x22] sm:$0x1]
    %v515 = vld [vmem:[#allocation3 + $0x2a] sm:$0x1]
    %v516 = vld [vmem:[#allocation3 + $0x32] sm:$0x1]
    %v517 = vld [vmem:[#allocation3 + $0x3a] sm:$0x1]
    %v518 = vpack.c.bf16 %v494, %v494
    %v519 = vpack.c.bf16 %v495, %v495
    %v520 = vpack.c.bf16 %v496, %v496
    %v521 = vpack.c.bf16 %v497, %v497
    %v522 = vpack.c.bf16 %v498, %v498
    %v523 = vpack.c.bf16 %v499, %v499
    %v524 = vpack.c.bf16 %v500, %v500
    %v525 = vpack.c.bf16 %v501, %v501
    %v534 = vunpack.c.l.b16 %v518
    %v535 = vunpack.c.l.b16 %v519
    %v536 = vunpack.c.l.b16 %v520
    %v537 = vunpack.c.l.b16 %v521
    %v538 = vunpack.c.l.b16 %v522
    %v539 = vunpack.c.l.b16 %v523
    %v540 = vunpack.c.l.b16 %v524
    %v541 = vunpack.c.l.b16 %v525
    %v542 = vrot.slane %v535, 7
    %v543 = vsel %vm408, %v542, %v534
    %v544 = vrot.slane %v536, 6
    %v545 = vsel %vm411, %v544, %v543
    %v546 = vrot.slane %v537, 5
    %v547 = vsel %vm414, %v546, %v545
    %v548 = vrot.slane %v538, 4
    %v549 = vsel %vm417, %v548, %v547
    %v550 = vrot.slane %v539, 3
    %v551 = vsel %vm420, %v550, %v549
    %v552 = vrot.slane %v540, 2
    %v553 = vsel %vm423, %v552, %v551
    %v554 = vrot.slane %v541, 1
    %v555 = vsel %vm426, %v554, %v553
    %v556 = vpack.c.b16 %v555, %v555
    %558 = vmatprep.subr.bf16.mxu0 0
    %559 = vmatpush1.bf16.msra.mxu0 %v279
    %560 = vmatprep.subr.bf16.mxu0 0
    %561 = vmatpush1.bf16.msra.mxu0 %v280
    %562 = vmatprep.subr.bf16.mxu0 0
    %563 = vmatpush1.bf16.msra.mxu0 %v281
    %564 = vmatprep.subr.bf16.mxu0 0
    %565 = vmatpush1.bf16.msra.mxu0 %v282
    %566 = vmatprep.subr.bf16.mxu0 0
    %567 = vmatpush1.bf16.msra.mxu0 %v283
    %568 = vmatprep.subr.bf16.mxu0 0
    %569 = vmatpush1.bf16.msra.mxu0 %v284
    %570 = vmatprep.subr.bf16.mxu0 0
    %571 = vmatpush1.bf16.msra.mxu0 %v285
    %572 = vmatprep.subr.bf16.mxu0 0
    %573 = vmatpush1.bf16.msra.mxu0 %v286
    %574 = vmatprep.subr.bf16.mxu0 0
    %575 = vmatpush1.bf16.msra.mxu0 0
    %576 = vmatprep.subr.bf16.mxu0 0
    %577 = vmatpush1.bf16.msra.mxu0 0
    %578 = vmatprep.subr.bf16.mxu0 0
    %579 = vmatpush1.bf16.msra.mxu0 0
    %580 = vmatprep.subr.bf16.mxu0 0
    %581 = vmatpush1.bf16.msra.mxu0 0
    %582 = vmatprep.subr.bf16.mxu0 0
    %583 = vmatpush1.bf16.msra.mxu0 0
    %584 = vmatprep.subr.bf16.mxu0 0
    %585 = vmatpush1.bf16.msra.mxu0 0
    %586 = vmatprep.subr.bf16.mxu0 0
    %587 = vmatpush1.bf16.msra.mxu0 0
    %588 = vmatprep.subr.bf16.mxu0 0
    %589 = vmatpush1.bf16.msra.mxu0 0
    %590 = vmatprep.mubr.bf16.mxu0 0
    %591 = vmatmul.mubr.bf16.gmra.mrb[0].mxu0 %v556
    %v592 = vpop.f32.mrb[0].mxu0
    %v593 = vadd.f32 0.0, %v592
    %v594 = vpop.f32.mrb[0].mxu0
    %v595 = vpop.f32.mrb[0].mxu0
    %v596 = vpop.f32.mrb[0].mxu0
    %597 = vdwg.mxu0
    %v599 = vrot.slane %v593, 1
    %v600 = vrot.slane %v593, 2
    %v601 = vrot.slane %v593, 3
    %v602 = vrot.slane %v593, 4
    %v603 = vrot.slane %v593, 5
    %v604 = vrot.slane %v593, 6
    %v605 = vrot.slane %v593, 7
    %v614 = vadd.f32 %v510, %v593
    %v615 = vadd.f32 %v511, %v599
    %v616 = vadd.f32 %v512, %v600
    %v617 = vadd.f32 %v513, %v601
    %v618 = vadd.f32 %v514, %v602
    %v619 = vadd.f32 %v515, %v603
    %v620 = vadd.f32 %v516, %v604
    %v621 = vadd.f32 %v517, %v605
    %v622 = vtanh.pop %v614
    %v623 = vtanh.pop %v615
    %v624 = vtanh.pop %v616
    %v625 = vtanh.pop %v617
    %v626 = vtanh.pop %v618
    %v627 = vtanh.pop %v619
    %v628 = vtanh.pop %v620
    %v629 = vtanh.pop %v621
    %630 = vst [vmem:[#allocation3 + $0x2] sm:$0x1] %v622
    %631 = vst [vmem:[#allocation3 + $0xa] sm:$0x1] %v623
    %632 = vst [vmem:[#allocation3 + $0x12] sm:$0x1] %v624
    %633 = vst [vmem:[#allocation3 + $0x1a] sm:$0x1] %v625
    %634 = vst [vmem:[#allocation3 + $0x22] sm:$0x1] %v626
    %635 = vst [vmem:[#allocation3 + $0x2a] sm:$0x1] %v627
    %636 = vst [vmem:[#allocation3 + $0x32] sm:$0x1] %v628
    %637 = vst [vmem:[#allocation3 + $0x3a] sm:$0x1] %v629
    %v638 = vld [vmem:[#allocation3 + $0x3] sm:$0x1]
    %v639 = vld [vmem:[#allocation3 + $0xb] sm:$0x1]
    %v640 = vld [vmem:[#allocation3 + $0x13] sm:$0x1]
    %v641 = vld [vmem:[#allocation3 + $0x1b] sm:$0x1]
    %v642 = vld [vmem:[#allocation3 + $0x23] sm:$0x1]
    %v643 = vld [vmem:[#allocation3 + $0x2b] sm:$0x1]
    %v644 = vld [vmem:[#allocation3 + $0x33] sm:$0x1]
    %v645 = vld [vmem:[#allocation3 + $0x3b] sm:$0x1]
    %v646 = vpack.c.bf16 %v622, %v622
    %v647 = vpack.c.bf16 %v623, %v623
    %v648 = vpack.c.bf16 %v624, %v624
    %v649 = vpack.c.bf16 %v625, %v625
    %v650 = vpack.c.bf16 %v626, %v626
    %v651 = vpack.c.bf16 %v627, %v627
    %v652 = vpack.c.bf16 %v628, %v628
    %v653 = vpack.c.bf16 %v629, %v629
    %v662 = vunpack.c.l.b16 %v646
    %v663 = vunpack.c.l.b16 %v647
    %v664 = vunpack.c.l.b16 %v648
    %v665 = vunpack.c.l.b16 %v649
    %v666 = vunpack.c.l.b16 %v650
    %v667 = vunpack.c.l.b16 %v651
    %v668 = vunpack.c.l.b16 %v652
    %v669 = vunpack.c.l.b16 %v653
    %v670 = vrot.slane %v663, 7
    %v671 = vsel %vm408, %v670, %v662
    %v672 = vrot.slane %v664, 6
    %v673 = vsel %vm411, %v672, %v671
    %v674 = vrot.slane %v665, 5
    %v675 = vsel %vm414, %v674, %v673
    %v676 = vrot.slane %v666, 4
    %v677 = vsel %vm417, %v676, %v675
    %v678 = vrot.slane %v667, 3
    %v679 = vsel %vm420, %v678, %v677
    %v680 = vrot.slane %v668, 2
    %v681 = vsel %vm423, %v680, %v679
    %v682 = vrot.slane %v669, 1
    %v683 = vsel %vm426, %v682, %v681
    %v684 = vpack.c.b16 %v683, %v683
    %686 = vmatprep.subr.bf16.mxu0 0
    %687 = vmatpush1.bf16.msra.mxu0 %v279
    %688 = vmatprep.subr.bf16.mxu0 0
    %689 = vmatpush1.bf16.msra.mxu0 %v280
    %690 = vmatprep.subr.bf16.mxu0 0
    %691 = vmatpush1.bf16.msra.mxu0 %v281
    %692 = vmatprep.subr.bf16.mxu0 0
    %693 = vmatpush1.bf16.msra.mxu0 %v282
    %694 = vmatprep.subr.bf16.mxu0 0
    %695 = vmatpush1.bf16.msra.mxu0 %v283
    %696 = vmatprep.subr.bf16.mxu0 0
    %697 = vmatpush1.bf16.msra.mxu0 %v284
    %698 = vmatprep.subr.bf16.mxu0 0
    %699 = vmatpush1.bf16.msra.mxu0 %v285
    %700 = vmatprep.subr.bf16.mxu0 0
    %701 = vmatpush1.bf16.msra.mxu0 %v286
    %702 = vmatprep.subr.bf16.mxu0 0
    %703 = vmatpush1.bf16.msra.mxu0 0
    %704 = vmatprep.subr.bf16.mxu0 0
    %705 = vmatpush1.bf16.msra.mxu0 0
    %706 = vmatprep.subr.bf16.mxu0 0
    %707 = vmatpush1.bf16.msra.mxu0 0
    %708 = vmatprep.subr.bf16.mxu0 0
    %709 = vmatpush1.bf16.msra.mxu0 0
    %710 = vmatprep.subr.bf16.mxu0 0
    %711 = vmatpush1.bf16.msra.mxu0 0
    %712 = vmatprep.subr.bf16.mxu0 0
    %713 = vmatpush1.bf16.msra.mxu0 0
    %714 = vmatprep.subr.bf16.mxu0 0
    %715 = vmatpush1.bf16.msra.mxu0 0
    %716 = vmatprep.subr.bf16.mxu0 0
    %717 = vmatpush1.bf16.msra.mxu0 0
    %718 = vmatprep.mubr.bf16.mxu0 0
    %719 = vmatmul.mubr.bf16.gmra.mrb[0].mxu0 %v684
    %v720 = vpop.f32.mrb[0].mxu0
    %v721 = vadd.f32 0.0, %v720
    %v722 = vpop.f32.mrb[0].mxu0
    %v723 = vpop.f32.mrb[0].mxu0
    %v724 = vpop.f32.mrb[0].mxu0
    %725 = vdwg.mxu0
    %v727 = vrot.slane %v721, 1
    %v728 = vrot.slane %v721, 2
    %v729 = vrot.slane %v721, 3
    %v730 = vrot.slane %v721, 4
    %v731 = vrot.slane %v721, 5
    %v732 = vrot.slane %v721, 6
    %v733 = vrot.slane %v721, 7
    %v742 = vadd.f32 %v638, %v721
    %v743 = vadd.f32 %v639, %v727
    %v744 = vadd.f32 %v640, %v728
    %v745 = vadd.f32 %v641, %v729
    %v746 = vadd.f32 %v642, %v730
    %v747 = vadd.f32 %v643, %v731
    %v748 = vadd.f32 %v644, %v732
    %v749 = vadd.f32 %v645, %v733
    %v750 = vtanh.pop %v742
    %v751 = vtanh.pop %v743
    %v752 = vtanh.pop %v744
    %v753 = vtanh.pop %v745
    %v754 = vtanh.pop %v746
    %v755 = vtanh.pop %v747
    %v756 = vtanh.pop %v748
    %v757 = vtanh.pop %v749
    %758 = vst [vmem:[#allocation3 + $0x3] sm:$0x1] %v750
    %759 = vst [vmem:[#allocation3 + $0xb] sm:$0x1] %v751
    %760 = vst [vmem:[#allocation3 + $0x13] sm:$0x1] %v752
    %761 = vst [vmem:[#allocation3 + $0x1b] sm:$0x1] %v753
    %762 = vst [vmem:[#allocation3 + $0x23] sm:$0x1] %v754
    %763 = vst [vmem:[#allocation3 + $0x2b] sm:$0x1] %v755
    %764 = vst [vmem:[#allocation3 + $0x33] sm:$0x1] %v756
    %765 = vst [vmem:[#allocation3 + $0x3b] sm:$0x1] %v757
    %v766 = vld [vmem:[#allocation3 + $0x4] sm:$0x1]
    %v767 = vld [vmem:[#allocation3 + $0xc] sm:$0x1]
    %v768 = vld [vmem:[#allocation3 + $0x14] sm:$0x1]
    %v769 = vld [vmem:[#allocation3 + $0x1c] sm:$0x1]
    %v770 = vld [vmem:[#allocation3 + $0x24] sm:$0x1]
    %v771 = vld [vmem:[#allocation3 + $0x2c] sm:$0x1]
    %v772 = vld [vmem:[#allocation3 + $0x34] sm:$0x1]
    %v773 = vld [vmem:[#allocation3 + $0x3c] sm:$0x1]
    %v774 = vpack.c.bf16 %v750, %v750
    %v775 = vpack.c.bf16 %v751, %v751
    %v776 = vpack.c.bf16 %v752, %v752
    %v777 = vpack.c.bf16 %v753, %v753
    %v778 = vpack.c.bf16 %v754, %v754
    %v779 = vpack.c.bf16 %v755, %v755
    %v780 = vpack.c.bf16 %v756, %v756
    %v781 = vpack.c.bf16 %v757, %v757
    %v790 = vunpack.c.l.b16 %v774
    %v791 = vunpack.c.l.b16 %v775
    %v792 = vunpack.c.l.b16 %v776
    %v793 = vunpack.c.l.b16 %v777
    %v794 = vunpack.c.l.b16 %v778
    %v795 = vunpack.c.l.b16 %v779
    %v796 = vunpack.c.l.b16 %v780
    %v797 = vunpack.c.l.b16 %v781
    %v798 = vrot.slane %v791, 7
    %v799 = vsel %vm408, %v798, %v790
    %v800 = vrot.slane %v792, 6
    %v801 = vsel %vm411, %v800, %v799
    %v802 = vrot.slane %v793, 5
    %v803 = vsel %vm414, %v802, %v801
    %v804 = vrot.slane %v794, 4
    %v805 = vsel %vm417, %v804, %v803
    %v806 = vrot.slane %v795, 3
    %v807 = vsel %vm420, %v806, %v805
    %v808 = vrot.slane %v796, 2
    %v809 = vsel %vm423, %v808, %v807
    %v810 = vrot.slane %v797, 1
    %v811 = vsel %vm426, %v810, %v809
    %v812 = vpack.c.b16 %v811, %v811
    %814 = vmatprep.subr.bf16.mxu0 0
    %815 = vmatpush1.bf16.msra.mxu0 %v279
    %816 = vmatprep.subr.bf16.mxu0 0
    %817 = vmatpush1.bf16.msra.mxu0 %v280
    %818 = vmatprep.subr.bf16.mxu0 0
    %819 = vmatpush1.bf16.msra.mxu0 %v281
    %820 = vmatprep.subr.bf16.mxu0 0
    %821 = vmatpush1.bf16.msra.mxu0 %v282
    %822 = vmatprep.subr.bf16.mxu0 0
    %823 = vmatpush1.bf16.msra.mxu0 %v283
    %824 = vmatprep.subr.bf16.mxu0 0
    %825 = vmatpush1.bf16.msra.mxu0 %v284
    %826 = vmatprep.subr.bf16.mxu0 0
    %827 = vmatpush1.bf16.msra.mxu0 %v285
    %828 = vmatprep.subr.bf16.mxu0 0
    %829 = vmatpush1.bf16.msra.mxu0 %v286
    %830 = vmatprep.subr.bf16.mxu0 0
    %831 = vmatpush1.bf16.msra.mxu0 0
    %832 = vmatprep.subr.bf16.mxu0 0
    %833 = vmatpush1.bf16.msra.mxu0 0
    %834 = vmatprep.subr.bf16.mxu0 0
    %835 = vmatpush1.bf16.msra.mxu0 0
    %836 = vmatprep.subr.bf16.mxu0 0
    %837 = vmatpush1.bf16.msra.mxu0 0
    %838 = vmatprep.subr.bf16.mxu0 0
    %839 = vmatpush1.bf16.msra.mxu0 0
    %840 = vmatprep.subr.bf16.mxu0 0
    %841 = vmatpush1.bf16.msra.mxu0 0
    %842 = vmatprep.subr.bf16.mxu0 0
    %843 = vmatpush1.bf16.msra.mxu0 0
    %844 = vmatprep.subr.bf16.mxu0 0
    %845 = vmatpush1.bf16.msra.mxu0 0
    %846 = vmatprep.mubr.bf16.mxu0 0
    %847 = vmatmul.mubr.bf16.gmra.mrb[0].mxu0 %v812
    %v848 = vpop.f32.mrb[0].mxu0
    %v849 = vadd.f32 0.0, %v848
    %v850 = vpop.f32.mrb[0].mxu0
    %v851 = vpop.f32.mrb[0].mxu0
    %v852 = vpop.f32.mrb[0].mxu0
    %853 = vdwg.mxu0
    %v855 = vrot.slane %v849, 1
    %v856 = vrot.slane %v849, 2
    %v857 = vrot.slane %v849, 3
    %v858 = vrot.slane %v849, 4
    %v859 = vrot.slane %v849, 5
    %v860 = vrot.slane %v849, 6
    %v861 = vrot.slane %v849, 7
    %v870 = vadd.f32 %v766, %v849
    %v871 = vadd.f32 %v767, %v855
    %v872 = vadd.f32 %v768, %v856
    %v873 = vadd.f32 %v769, %v857
    %v874 = vadd.f32 %v770, %v858
    %v875 = vadd.f32 %v771, %v859
    %v876 = vadd.f32 %v772, %v860
    %v877 = vadd.f32 %v773, %v861
    %v878 = vtanh.pop %v870
    %v879 = vtanh.pop %v871
    %v880 = vtanh.pop %v872
    %v881 = vtanh.pop %v873
    %v882 = vtanh.pop %v874
    %v883 = vtanh.pop %v875
    %v884 = vtanh.pop %v876
    %v885 = vtanh.pop %v877
    %886 = vst [vmem:[#allocation3 + $0x4] sm:$0x1] %v878
    %887 = vst [vmem:[#allocation3 + $0xc] sm:$0x1] %v879
    %888 = vst [vmem:[#allocation3 + $0x14] sm:$0x1] %v880
    %889 = vst [vmem:[#allocation3 + $0x1c] sm:$0x1] %v881
    %890 = vst [vmem:[#allocation3 + $0x24] sm:$0x1] %v882
    %891 = vst [vmem:[#allocation3 + $0x2c] sm:$0x1] %v883
    %892 = vst [vmem:[#allocation3 + $0x34] sm:$0x1] %v884
    %893 = vst [vmem:[#allocation3 + $0x3c] sm:$0x1] %v885
    %v894 = vld [vmem:[#allocation3 + $0x5] sm:$0x1]
    %v895 = vld [vmem:[#allocation3 + $0xd] sm:$0x1]
    %v896 = vld [vmem:[#allocation3 + $0x15] sm:$0x1]
    %v897 = vld [vmem:[#allocation3 + $0x1d] sm:$0x1]
    %v898 = vld [vmem:[#allocation3 + $0x25] sm:$0x1]
    %v899 = vld [vmem:[#allocation3 + $0x2d] sm:$0x1]
    %v900 = vld [vmem:[#allocation3 + $0x35] sm:$0x1]
    %v901 = vld [vmem:[#allocation3 + $0x3d] sm:$0x1]
    %v902 = vpack.c.bf16 %v878, %v878
    %v903 = vpack.c.bf16 %v879, %v879
    %v904 = vpack.c.bf16 %v880, %v880
    %v905 = vpack.c.bf16 %v881, %v881
    %v906 = vpack.c.bf16 %v882, %v882
    %v907 = vpack.c.bf16 %v883, %v883
    %v908 = vpack.c.bf16 %v884, %v884
    %v909 = vpack.c.bf16 %v885, %v885
    %v918 = vunpack.c.l.b16 %v902
    %v919 = vunpack.c.l.b16 %v903
    %v920 = vunpack.c.l.b16 %v904
    %v921 = vunpack.c.l.b16 %v905
    %v922 = vunpack.c.l.b16 %v906
    %v923 = vunpack.c.l.b16 %v907
    %v924 = vunpack.c.l.b16 %v908
    %v925 = vunpack.c.l.b16 %v909
    %v926 = vrot.slane %v919, 7
    %v927 = vsel %vm408, %v926, %v918
    %v928 = vrot.slane %v920, 6
    %v929 = vsel %vm411, %v928, %v927
    %v930 = vrot.slane %v921, 5
    %v931 = vsel %vm414, %v930, %v929
    %v932 = vrot.slane %v922, 4
    %v933 = vsel %vm417, %v932, %v931
    %v934 = vrot.slane %v923, 3
    %v935 = vsel %vm420, %v934, %v933
    %v936 = vrot.slane %v924, 2
    %v937 = vsel %vm423, %v936, %v935
    %v938 = vrot.slane %v925, 1
    %v939 = vsel %vm426, %v938, %v937
    %v940 = vpack.c.b16 %v939, %v939
    %942 = vmatprep.subr.bf16.mxu0 0
    %943 = vmatpush1.bf16.msra.mxu0 %v279
    %944 = vmatprep.subr.bf16.mxu0 0
    %945 = vmatpush1.bf16.msra.mxu0 %v280
    %946 = vmatprep.subr.bf16.mxu0 0
    %947 = vmatpush1.bf16.msra.mxu0 %v281
    %948 = vmatprep.subr.bf16.mxu0 0
    %949 = vmatpush1.bf16.msra.mxu0 %v282
    %950 = vmatprep.subr.bf16.mxu0 0
    %951 = vmatpush1.bf16.msra.mxu0 %v283
    %952 = vmatprep.subr.bf16.mxu0 0
    %953 = vmatpush1.bf16.msra.mxu0 %v284
    %954 = vmatprep.subr.bf16.mxu0 0
    %955 = vmatpush1.bf16.msra.mxu0 %v285
    %956 = vmatprep.subr.bf16.mxu0 0
    %957 = vmatpush1.bf16.msra.mxu0 %v286
    %958 = vmatprep.subr.bf16.mxu0 0
    %959 = vmatpush1.bf16.msra.mxu0 0
    %960 = vmatprep.subr.bf16.mxu0 0
    %961 = vmatpush1.bf16.msra.mxu0 0
    %962 = vmatprep.subr.bf16.mxu0 0
    %963 = vmatpush1.bf16.msra.mxu0 0
    %964 = vmatprep.subr.bf16.mxu0 0
    %965 = vmatpush1.bf16.msra.mxu0 0
    %966 = vmatprep.subr.bf16.mxu0 0
    %967 = vmatpush1.bf16.msra.mxu0 0
    %968 = vmatprep.subr.bf16.mxu0 0
    %969 = vmatpush1.bf16.msra.mxu0 0
    %970 = vmatprep.subr.bf16.mxu0 0
    %971 = vmatpush1.bf16.msra.mxu0 0
    %972 = vmatprep.subr.bf16.mxu0 0
    %973 = vmatpush1.bf16.msra.mxu0 0
    %974 = vmatprep.mubr.bf16.mxu0 0
    %975 = vmatmul.mubr.bf16.gmra.mrb[0].mxu0 %v940
    %v976 = vpop.f32.mrb[0].mxu0
    %v977 = vadd.f32 0.0, %v976
    %v978 = vpop.f32.mrb[0].mxu0
    %v979 = vpop.f32.mrb[0].mxu0
    %v980 = vpop.f32.mrb[0].mxu0
    %981 = vdwg.mxu0
    %v983 = vrot.slane %v977, 1
    %v984 = vrot.slane %v977, 2
    %v985 = vrot.slane %v977, 3
    %v986 = vrot.slane %v977, 4
    %v987 = vrot.slane %v977, 5
    %v988 = vrot.slane %v977, 6
    %v989 = vrot.slane %v977, 7
    %v998 = vadd.f32 %v894, %v977
    %v999 = vadd.f32 %v895, %v983
    %v1000 = vadd.f32 %v896, %v984
    %v1001 = vadd.f32 %v897, %v985
    %v1002 = vadd.f32 %v898, %v986
    %v1003 = vadd.f32 %v899, %v987
    %v1004 = vadd.f32 %v900, %v988
    %v1005 = vadd.f32 %v901, %v989
    %v1006 = vtanh.pop %v998
    %v1007 = vtanh.pop %v999
    %v1008 = vtanh.pop %v1000
    %v1009 = vtanh.pop %v1001
    %v1010 = vtanh.pop %v1002
    %v1011 = vtanh.pop %v1003
    %v1012 = vtanh.pop %v1004
    %v1013 = vtanh.pop %v1005
    %1014 = vst [vmem:[#allocation3 + $0x5] sm:$0x1] %v1006
    %1015 = vst [vmem:[#allocation3 + $0xd] sm:$0x1] %v1007
    %1016 = vst [vmem:[#allocation3 + $0x15] sm:$0x1] %v1008
    %1017 = vst [vmem:[#allocation3 + $0x1d] sm:$0x1] %v1009
    %1018 = vst [vmem:[#allocation3 + $0x25] sm:$0x1] %v1010
    %1019 = vst [vmem:[#allocation3 + $0x2d] sm:$0x1] %v1011
    %1020 = vst [vmem:[#allocation3 + $0x35] sm:$0x1] %v1012
    %1021 = vst [vmem:[#allocation3 + $0x3d] sm:$0x1] %v1013
    %v1022 = vld [vmem:[#allocation3 + $0x6] sm:$0x1]
    %v1023 = vld [vmem:[#allocation3 + $0xe] sm:$0x1]
    %v1024 = vld [vmem:[#allocation3 + $0x16] sm:$0x1]
    %v1025 = vld [vmem:[#allocation3 + $0x1e] sm:$0x1]
    %v1026 = vld [vmem:[#allocation3 + $0x26] sm:$0x1]
    %v1027 = vld [vmem:[#allocation3 + $0x2e] sm:$0x1]
    %v1028 = vld [vmem:[#allocation3 + $0x36] sm:$0x1]
    %v1029 = vld [vmem:[#allocation3 + $0x3e] sm:$0x1]
    %v1030 = vpack.c.bf16 %v1006, %v1006
    %v1031 = vpack.c.bf16 %v1007, %v1007
    %v1032 = vpack.c.bf16 %v1008, %v1008
    %v1033 = vpack.c.bf16 %v1009, %v1009
    %v1034 = vpack.c.bf16 %v1010, %v1010
    %v1035 = vpack.c.bf16 %v1011, %v1011
    %v1036 = vpack.c.bf16 %v1012, %v1012
    %v1037 = vpack.c.bf16 %v1013, %v1013
    %v1046 = vunpack.c.l.b16 %v1030
    %v1047 = vunpack.c.l.b16 %v1031
    %v1048 = vunpack.c.l.b16 %v1032
    %v1049 = vunpack.c.l.b16 %v1033
    %v1050 = vunpack.c.l.b16 %v1034
    %v1051 = vunpack.c.l.b16 %v1035
    %v1052 = vunpack.c.l.b16 %v1036
    %v1053 = vunpack.c.l.b16 %v1037
    %v1054 = vrot.slane %v1047, 7
    %v1055 = vsel %vm408, %v1054, %v1046
    %v1056 = vrot.slane %v1048, 6
    %v1057 = vsel %vm411, %v1056, %v1055
    %v1058 = vrot.slane %v1049, 5
    %v1059 = vsel %vm414, %v1058, %v1057
    %v1060 = vrot.slane %v1050, 4
    %v1061 = vsel %vm417, %v1060, %v1059
    %v1062 = vrot.slane %v1051, 3
    %v1063 = vsel %vm420, %v1062, %v1061
    %v1064 = vrot.slane %v1052, 2
    %v1065 = vsel %vm423, %v1064, %v1063
    %v1066 = vrot.slane %v1053, 1
    %v1067 = vsel %vm426, %v1066, %v1065
    %v1068 = vpack.c.b16 %v1067, %v1067
    %1070 = vmatprep.subr.bf16.mxu0 0
    %1071 = vmatpush1.bf16.msra.mxu0 %v279
    %1072 = vmatprep.subr.bf16.mxu0 0
    %1073 = vmatpush1.bf16.msra.mxu0 %v280
    %1074 = vmatprep.subr.bf16.mxu0 0
    %1075 = vmatpush1.bf16.msra.mxu0 %v281
    %1076 = vmatprep.subr.bf16.mxu0 0
    %1077 = vmatpush1.bf16.msra.mxu0 %v282
    %1078 = vmatprep.subr.bf16.mxu0 0
    %1079 = vmatpush1.bf16.msra.mxu0 %v283
    %1080 = vmatprep.subr.bf16.mxu0 0
    %1081 = vmatpush1.bf16.msra.mxu0 %v284
    %1082 = vmatprep.subr.bf16.mxu0 0
    %1083 = vmatpush1.bf16.msra.mxu0 %v285
    %1084 = vmatprep.subr.bf16.mxu0 0
    %1085 = vmatpush1.bf16.msra.mxu0 %v286
    %1086 = vmatprep.subr.bf16.mxu0 0
    %1087 = vmatpush1.bf16.msra.mxu0 0
    %1088 = vmatprep.subr.bf16.mxu0 0
    %1089 = vmatpush1.bf16.msra.mxu0 0
    %1090 = vmatprep.subr.bf16.mxu0 0
    %1091 = vmatpush1.bf16.msra.mxu0 0
    %1092 = vmatprep.subr.bf16.mxu0 0
    %1093 = vmatpush1.bf16.msra.mxu0 0
    %1094 = vmatprep.subr.bf16.mxu0 0
    %1095 = vmatpush1.bf16.msra.mxu0 0
    %1096 = vmatprep.subr.bf16.mxu0 0
    %1097 = vmatpush1.bf16.msra.mxu0 0
    %1098 = vmatprep.subr.bf16.mxu0 0
    %1099 = vmatpush1.bf16.msra.mxu0 0
    %1100 = vmatprep.subr.bf16.mxu0 0
    %1101 = vmatpush1.bf16.msra.mxu0 0
    %1102 = vmatprep.mubr.bf16.mxu0 0
    %1103 = vmatmul.mubr.bf16.gmra.mrb[0].mxu0 %v1068
    %v1104 = vpop.f32.mrb[0].mxu0
    %v1105 = vadd.f32 0.0, %v1104
    %v1106 = vpop.f32.mrb[0].mxu0
    %v1107 = vpop.f32.mrb[0].mxu0
    %v1108 = vpop.f32.mrb[0].mxu0
    %1109 = vdwg.mxu0
    %v1111 = vrot.slane %v1105, 1
    %v1112 = vrot.slane %v1105, 2
    %v1113 = vrot.slane %v1105, 3
    %v1114 = vrot.slane %v1105, 4
    %v1115 = vrot.slane %v1105, 5
    %v1116 = vrot.slane %v1105, 6
    %v1117 = vrot.slane %v1105, 7
    %v1126 = vadd.f32 %v1022, %v1105
    %v1127 = vadd.f32 %v1023, %v1111
    %v1128 = vadd.f32 %v1024, %v1112
    %v1129 = vadd.f32 %v1025, %v1113
    %v1130 = vadd.f32 %v1026, %v1114
    %v1131 = vadd.f32 %v1027, %v1115
    %v1132 = vadd.f32 %v1028, %v1116
    %v1133 = vadd.f32 %v1029, %v1117
    %v1134 = vtanh.pop %v1126
    %v1135 = vtanh.pop %v1127
    %v1136 = vtanh.pop %v1128
    %v1137 = vtanh.pop %v1129
    %v1138 = vtanh.pop %v1130
    %v1139 = vtanh.pop %v1131
    %v1140 = vtanh.pop %v1132
    %v1141 = vtanh.pop %v1133
    %1142 = vst [vmem:[#allocation3 + $0x6] sm:$0x1] %v1134
    %1143 = vst [vmem:[#allocation3 + $0xe] sm:$0x1] %v1135
    %1144 = vst [vmem:[#allocation3 + $0x16] sm:$0x1] %v1136
    %1145 = vst [vmem:[#allocation3 + $0x1e] sm:$0x1] %v1137
    %1146 = vst [vmem:[#allocation3 + $0x26] sm:$0x1] %v1138
    %1147 = vst [vmem:[#allocation3 + $0x2e] sm:$0x1] %v1139
    %1148 = vst [vmem:[#allocation3 + $0x36] sm:$0x1] %v1140
    %1149 = vst [vmem:[#allocation3 + $0x3e] sm:$0x1] %v1141
    %v1150 = vld [vmem:[#allocation3 + $0x7] sm:$0x1]
    %v1151 = vld [vmem:[#allocation3 + $0xf] sm:$0x1]
    %v1152 = vld [vmem:[#allocation3 + $0x17] sm:$0x1]
    %v1153 = vld [vmem:[#allocation3 + $0x1f] sm:$0x1]
    %v1154 = vld [vmem:[#allocation3 + $0x27] sm:$0x1]
    %v1155 = vld [vmem:[#allocation3 + $0x2f] sm:$0x1]
    %v1156 = vld [vmem:[#allocation3 + $0x37] sm:$0x1]
    %v1157 = vld [vmem:[#allocation3 + $0x3f] sm:$0x1]
    %v1158 = vpack.c.bf16 %v1134, %v1134
    %v1159 = vpack.c.bf16 %v1135, %v1135
    %v1160 = vpack.c.bf16 %v1136, %v1136
    %v1161 = vpack.c.bf16 %v1137, %v1137
    %v1162 = vpack.c.bf16 %v1138, %v1138
    %v1163 = vpack.c.bf16 %v1139, %v1139
    %v1164 = vpack.c.bf16 %v1140, %v1140
    %v1165 = vpack.c.bf16 %v1141, %v1141
    %v1174 = vunpack.c.l.b16 %v1158
    %v1175 = vunpack.c.l.b16 %v1159
    %v1176 = vunpack.c.l.b16 %v1160
    %v1177 = vunpack.c.l.b16 %v1161
    %v1178 = vunpack.c.l.b16 %v1162
    %v1179 = vunpack.c.l.b16 %v1163
    %v1180 = vunpack.c.l.b16 %v1164
    %v1181 = vunpack.c.l.b16 %v1165
    %v1182 = vrot.slane %v1175, 7
    %v1183 = vsel %vm408, %v1182, %v1174
    %v1184 = vrot.slane %v1176, 6
    %v1185 = vsel %vm411, %v1184, %v1183
    %v1186 = vrot.slane %v1177, 5
    %v1187 = vsel %vm414, %v1186, %v1185
    %v1188 = vrot.slane %v1178, 4
    %v1189 = vsel %vm417, %v1188, %v1187
    %v1190 = vrot.slane %v1179, 3
    %v1191 = vsel %vm420, %v1190, %v1189
    %v1192 = vrot.slane %v1180, 2
    %v1193 = vsel %vm423, %v1192, %v1191
    %v1194 = vrot.slane %v1181, 1
    %v1195 = vsel %vm426, %v1194, %v1193
    %v1196 = vpack.c.b16 %v1195, %v1195
    %1198 = vmatprep.subr.bf16.mxu0 0
    %1199 = vmatpush1.bf16.msra.mxu0 %v279
    %1200 = vmatprep.subr.bf16.mxu0 0
    %1201 = vmatpush1.bf16.msra.mxu0 %v280
    %1202 = vmatprep.subr.bf16.mxu0 0
    %1203 = vmatpush1.bf16.msra.mxu0 %v281
    %1204 = vmatprep.subr.bf16.mxu0 0
    %1205 = vmatpush1.bf16.msra.mxu0 %v282
    %1206 = vmatprep.subr.bf16.mxu0 0
    %1207 = vmatpush1.bf16.msra.mxu0 %v283
    %1208 = vmatprep.subr.bf16.mxu0 0
    %1209 = vmatpush1.bf16.msra.mxu0 %v284
    %1210 = vmatprep.subr.bf16.mxu0 0
    %1211 = vmatpush1.bf16.msra.mxu0 %v285
    %1212 = vmatprep.subr.bf16.mxu0 0
    %1213 = vmatpush1.bf16.msra.mxu0 %v286
    %1214 = vmatprep.subr.bf16.mxu0 0
    %1215 = vmatpush1.bf16.msra.mxu0 0
    %1216 = vmatprep.subr.bf16.mxu0 0
    %1217 = vmatpush1.bf16.msra.mxu0 0
    %1218 = vmatprep.subr.bf16.mxu0 0
    %1219 = vmatpush1.bf16.msra.mxu0 0
    %1220 = vmatprep.subr.bf16.mxu0 0
    %1221 = vmatpush1.bf16.msra.mxu0 0
    %1222 = vmatprep.subr.bf16.mxu0 0
    %1223 = vmatpush1.bf16.msra.mxu0 0
    %1224 = vmatprep.subr.bf16.mxu0 0
    %1225 = vmatpush1.bf16.msra.mxu0 0
    %1226 = vmatprep.subr.bf16.mxu0 0
    %1227 = vmatpush1.bf16.msra.mxu0 0
    %1228 = vmatprep.subr.bf16.mxu0 0
    %1229 = vmatpush1.bf16.msra.mxu0 0
    %1230 = vmatprep.mubr.bf16.mxu0 0
    %1231 = vmatmul.mubr.bf16.gmra.mrb[0].mxu0 %v1196
    %v1232 = vpop.f32.mrb[0].mxu0
    %v1233 = vadd.f32 0.0, %v1232
    %v1234 = vpop.f32.mrb[0].mxu0
    %v1235 = vpop.f32.mrb[0].mxu0
    %v1236 = vpop.f32.mrb[0].mxu0
    %1237 = vdwg.mxu0
    %v1239 = vrot.slane %v1233, 1
    %v1240 = vrot.slane %v1233, 2
    %v1241 = vrot.slane %v1233, 3
    %v1242 = vrot.slane %v1233, 4
    %v1243 = vrot.slane %v1233, 5
    %v1244 = vrot.slane %v1233, 6
    %v1245 = vrot.slane %v1233, 7
    %v1254 = vadd.f32 %v1150, %v1233
    %v1255 = vadd.f32 %v1151, %v1239
    %v1256 = vadd.f32 %v1152, %v1240
    %v1257 = vadd.f32 %v1153, %v1241
    %v1258 = vadd.f32 %v1154, %v1242
    %v1259 = vadd.f32 %v1155, %v1243
    %v1260 = vadd.f32 %v1156, %v1244
    %v1261 = vadd.f32 %v1157, %v1245
    %v1262 = vtanh.pop %v1254
    %v1263 = vtanh.pop %v1255
    %v1264 = vtanh.pop %v1256
    %v1265 = vtanh.pop %v1257
    %v1266 = vtanh.pop %v1258
    %v1267 = vtanh.pop %v1259
    %v1268 = vtanh.pop %v1260
    %v1269 = vtanh.pop %v1261
    %1270 = vst [vmem:[#allocation3 + $0x7] sm:$0x1] %v1262
    %1271 = vst [vmem:[#allocation3 + $0xf] sm:$0x1] %v1263
    %1272 = vst [vmem:[#allocation3 + $0x17] sm:$0x1] %v1264
    %1273 = vst [vmem:[#allocation3 + $0x1f] sm:$0x1] %v1265
    %1274 = vst [vmem:[#allocation3 + $0x27] sm:$0x1] %v1266
    %1275 = vst [vmem:[#allocation3 + $0x2f] sm:$0x1] %v1267
    %1276 = vst [vmem:[#allocation3 + $0x37] sm:$0x1] %v1268
    %1277 = vst [vmem:[#allocation3 + $0x3f] sm:$0x1] %v1269
    %v1286 = vrot.slane %v1263, 7
    %v1287 = vsel %vm408, %v1286, %v1262
    %v1288 = vrot.slane %v1264, 6
    %v1289 = vsel %vm411, %v1288, %v1287
    %v1290 = vrot.slane %v1265, 5
    %v1291 = vsel %vm414, %v1290, %v1289
    %v1292 = vrot.slane %v1266, 4
    %v1293 = vsel %vm417, %v1292, %v1291
    %v1294 = vrot.slane %v1267, 3
    %v1295 = vsel %vm420, %v1294, %v1293
    %v1296 = vrot.slane %v1268, 2
    %v1297 = vsel %vm423, %v1296, %v1295
    %v1298 = vrot.slane %v1269, 1
    %v1299 = vsel %vm426, %v1298, %v1297
    %1301 = vst [vmem:[#allocation2] sm:$0xff] %v1299
    %v1302 = vld [vmem:[#allocation4] sm:$0xff]
    %v1303 = vld [vmem:[#allocation4 + $0x8] sm:$0xff]
    %v1304 = vld [vmem:[#allocation4 + $0x10] sm:$0xff]
    %v1305 = vld [vmem:[#allocation4 + $0x18] sm:$0xff]
    %v1306 = vld [vmem:[#allocation4 + $0x20] sm:$0xff]
    %v1307 = vld [vmem:[#allocation4 + $0x28] sm:$0xff]
    %v1308 = vld [vmem:[#allocation4 + $0x30] sm:$0xff]
    %v1309 = vld [vmem:[#allocation4 + $0x38] sm:$0xff]
    %v1310 = vld [vmem:[#allocation3] sm:$0xff]
    %v1311 = vld [vmem:[#allocation3 + $0x8] sm:$0xff]
    %v1312 = vld [vmem:[#allocation3 + $0x10] sm:$0xff]
    %v1313 = vld [vmem:[#allocation3 + $0x18] sm:$0xff]
    %v1314 = vld [vmem:[#allocation3 + $0x20] sm:$0xff]
    %v1315 = vld [vmem:[#allocation3 + $0x28] sm:$0xff]
    %v1316 = vld [vmem:[#allocation3 + $0x30] sm:$0xff]
    %v1317 = vld [vmem:[#allocation3 + $0x38] sm:$0xff]
    %v1318 = vadd.f32 %v1302, %v1310
    %v1319 = vadd.f32 %v1303, %v1311
    %v1320 = vadd.f32 %v1304, %v1312
    %v1321 = vadd.f32 %v1305, %v1313
    %v1322 = vadd.f32 %v1306, %v1314
    %v1323 = vadd.f32 %v1307, %v1315
    %v1324 = vadd.f32 %v1308, %v1316
    %v1325 = vadd.f32 %v1309, %v1317
    %1326 = vst [vmem:[#allocation10] sm:$0xff] %v1318
    %1327 = vst [vmem:[#allocation10 + $0x8] sm:$0xff] %v1319
    %1328 = vst [vmem:[#allocation10 + $0x10] sm:$0xff] %v1320
    %1329 = vst [vmem:[#allocation10 + $0x18] sm:$0xff] %v1321
    %1330 = vst [vmem:[#allocation10 + $0x20] sm:$0xff] %v1322
    %1331 = vst [vmem:[#allocation10 + $0x28] sm:$0xff] %v1323
    %1332 = vst [vmem:[#allocation10 + $0x30] sm:$0xff] %v1324
    %1333 = vst [vmem:[#allocation10 + $0x38] sm:$0xff] %v1325
    // Predicated region
    $region34: #{tpu_custom_call.1} parent=1 // pred_check
      _
    $region35: #{tpu_custom_call.1} parent=1 // pred_check_branch
      %1335 = sbr.rel (0) target = $region37
    $region36: #{tpu_custom_call.1} parent=1 // pred_region
      %s1337 = ssub.s32 1024, 1024
      %1338 = vsyncadd [#allocation6], %s1337
      %s1339 = sshll.u32 [#allocation10], 4
      %s1340 = int_to_ptr.vmem [resolvable:$true] %s1339
      %1345 = dma.vmem_to_hbm [thread:$0]  %s1340, 1024, %s4, [#allocation6], 128, 128, 8
    $region37: #{tpu_custom_call.1} parent=1 // pred_fallthru
      _
    // Predicated region
    $region38: #{tpu_custom_call.1} parent=1 // pred_check
      _
    $region39: #{tpu_custom_call.1} parent=1 // pred_check_branch
      %1347 = sbr.rel (0) target = $region41
    $region40: #{tpu_custom_call.1} parent=1 // pred_region
      %1348 = dma.done [#allocation6], 1024
    $region41: #{tpu_custom_call.1} parent=1 // pred_fallthru
      _
    %1349 = vsyncpa [#allocation5], 1
    %1350 = vsyncpa [#allocation8], 1
    %1351 = vsyncpa [#allocation6], 1

</llo_original>
